<compile_context>
chip_gen: v5e
topology: v5e:2x2
jax: 0.10.0
libtpu: 0.0.40
codegen_flags: <defaults>
</compile_context>

<pallas_src>
from functools import partial

import jax
import jax.numpy as jnp
from jax.experimental import pallas as pl
from jax.experimental.pallas import tpu as pltpu

INPUT_DIM = 204
HIDDEN_DIMS = [512, 256, 128]
NUM_CLASSES = 9
BN_EPS = 1e-5

PADDED_OUT_DIM = 128     # 9 -> 128: lane-dense final store (unmasked vst)
MIN_SPLIT_TILE = 256     # keep tiles >= 256 rows (MXU fill) when splitting for v7x


def _round_up(x, m):
    return (x + m - 1) // m * m


def _pick_tile(batch, tile_b):
    """Batch tile: big (amortize per-step overhead) but with >=2 grid steps
    when the batch is large enough, so v7x's two TensorCores both get work."""
    b16 = _round_up(max(batch, 1), 16)
    if b16 >= 2 * MIN_SPLIT_TILE:
        # Split into >= 2 grid steps; each tile stays >= 256 rows.
        return min(tile_b, _round_up(b16 // 2, 16))
    return min(tile_b, b16)


def _mlp_kernel(x_ref, w1, b1, w2, b2, w3, b3, w4, b4, o_ref):
    """One batch tile of the fused 4-layer MLP.

    Dots run on the MXU with bf16 operands and f32 accumulation; the
    bias-add + ReLU epilogue runs in f32 on the VPU, casting back to bf16 only
    right before the next dot. Weights/biases are VMEM-resident across steps.
    """
    # f32 -> bf16 cast happens here instead of an extra XLA pass in the wrapper.
    h = x_ref[...].astype(jnp.bfloat16)                           # (TILE_B, 204)
    h = jnp.dot(h, w1[...], preferred_element_type=jnp.float32) + b1[...]
    h = jnp.maximum(h, 0.0).astype(jnp.bfloat16)
    h = jnp.dot(h, w2[...], preferred_element_type=jnp.float32) + b2[...]
    h = jnp.maximum(h, 0.0).astype(jnp.bfloat16)
    h = jnp.dot(h, w3[...], preferred_element_type=jnp.float32) + b3[...]
    h = jnp.maximum(h, 0.0).astype(jnp.bfloat16)
    # bf16 lane-dense (128-wide) final store; real logits are cols [:9].
    o_ref[...] = (jnp.dot(h, w4[...], preferred_element_type=jnp.float32)
                  + b4[...]).astype(o_ref.dtype)


def prepare_kernel_params(params):
    """One-time prep (hoisted out of the per-call path).

    - W4/b4 get zero-padded output columns 9 -> 128 (lane-dense final store).
    - Weights become bf16 (MXU operands); biases stay f32 (f32 epilogue).
    """
    kparams = []
    last = len(params) - 1
    for i, (w, b) in enumerate(params):
        if i == last:
            w = jnp.pad(w, ((0, 0), (0, PADDED_OUT_DIM - w.shape[1])))
            b = jnp.pad(b, ((0, 0), (0, PADDED_OUT_DIM - b.shape[1])))
        kparams.append((w.astype(jnp.bfloat16), b.astype(jnp.float32)))
    return kparams


@partial(jax.jit, static_argnames=("tile_b",))
def mlp_forward(x, kparams, tile_b=1024):
    """Fused MLP forward. x: [B, 204] float32, kparams from prepare_kernel_params.
    Returns [B, 9] float32."""
    B = x.shape[0]
    tile = _pick_tile(B, tile_b)
    padded_b = _round_up(max(B, 1), tile)
    grid = padded_b // tile

    # Only pad batch rows (no feature pad, no dtype cast) — and only if needed.
    xp = x if padded_b == B else jnp.pad(x, ((0, padded_b - B), (0, 0)))

    flat = [a for wb in kparams for a in wb]
    # Weights/biases: full-shape blocks, constant index_map -> VMEM-resident.
    resident_specs = [pl.BlockSpec(a.shape, lambda i: (0, 0)) for a in flat]

    out = pl.pallas_call(
        _mlp_kernel,
        out_shape=jax.ShapeDtypeStruct((padded_b, PADDED_OUT_DIM), jnp.bfloat16),
        grid=(grid,),
        in_specs=[pl.BlockSpec((tile, INPUT_DIM), lambda i: (i, 0))]
                 + resident_specs,
        out_specs=pl.BlockSpec((tile, PADDED_OUT_DIM), lambda i: (i, 0)),
        compiler_params=pltpu.CompilerParams(
            dimension_semantics=("parallel",)),
    )(xp, *flat)

    return out[:B, :NUM_CLASSES].astype(jnp.float32)


def init_params(key):
    """Deterministic init mimicking PyTorch nn.Linear defaults
    (U(-1/sqrt(in), 1/sqrt(in))), then fold freshly-initialized BatchNorm1d
    (mean=0, var=1, gamma=1, beta=0) into the first three Linear layers."""
    dims = [INPUT_DIM] + HIDDEN_DIMS + [NUM_CLASSES]
    params = []
    for i, (d_in, d_out) in enumerate(zip(dims[:-1], dims[1:])):
        key, kw, kb = jax.random.split(key, 3)
        bound = 1.0 / jnp.sqrt(jnp.float32(d_in))
        w = jax.random.uniform(kw, (d_in, d_out), jnp.float32, -bound, bound)
        b = jax.random.uniform(kb, (1, d_out), jnp.float32, -bound, bound)
        if i < len(HIDDEN_DIMS):
            # Fold BatchNorm1d (eval mode, default stats) into Linear.
            gamma = jnp.ones((d_out,), jnp.float32)
            beta = jnp.zeros((d_out,), jnp.float32)
            running_mean = jnp.zeros((d_out,), jnp.float32)
            running_var = jnp.ones((d_out,), jnp.float32)
            scale = gamma / jnp.sqrt(running_var + BN_EPS)
            w = w * scale[None, :]
            b = (b - running_mean[None, :]) * scale[None, :] + beta[None, :]
        params.append((w, b))
    return params


def mlp_reference(x, params):
    """Pure-JAX f32 reference for correctness checking (eval-mode semantics)."""
    h = x
    for i, (w, b) in enumerate(params):
        h = h @ w + b
        if i < len(params) - 1:
            h = jnp.maximum(h, 0.0)
    return h


if __name__ == "__main__":
    key = jax.random.PRNGKey(0)
    key, kx = jax.random.split(key)
    params = init_params(key)
    kparams = prepare_kernel_params(params)   # hoisted: once, not per forward

    # Small batch that still exercises a 2-step grid (tile=32, grid=2).
    B = 64
    x = jax.random.normal(kx, (B, INPUT_DIM), jnp.float32)
    out = jax.block_until_ready(mlp_forward(x, kparams))
    ref = mlp_reference(x, params)
    assert out.shape == (B, NUM_CLASSES), out.shape
    # bf16 MXU operands + bf16 output store vs. pure-f32 reference.
    max_diff = jnp.max(jnp.abs(out - ref))
    assert jnp.allclose(out, ref, atol=5e-2, rtol=5e-2), f"max abs diff {max_diff}"

    # Tiny ragged batch: batch-padding path + single small block.
    x_small = x[:8]
    out_small = jax.block_until_ready(mlp_forward(x_small, kparams))
    assert out_small.shape == (8, NUM_CLASSES), out_small.shape
    assert jnp.allclose(out_small, ref[:8], atol=5e-2, rtol=5e-2), \
        f"max abs diff {jnp.max(jnp.abs(out_small - ref[:8]))}"

    print("KERNEL_OK")
</pallas_src>

<mosaic_0001>
module attributes {stable_mosaic.version = 11 : i64} {
  func.func @_mlp_kernel(%arg0: i32, %arg1: memref<64x204xf32, #tpu.memory_space<vmem>>, %arg2: memref<204x512xbf16, #tpu.memory_space<vmem>>, %arg3: memref<1x512xf32, #tpu.memory_space<vmem>>, %arg4: memref<512x256xbf16, #tpu.memory_space<vmem>>, %arg5: memref<1x256xf32, #tpu.memory_space<vmem>>, %arg6: memref<256x128xbf16, #tpu.memory_space<vmem>>, %arg7: memref<1x128xf32, #tpu.memory_space<vmem>>, %arg8: memref<128x128xbf16, #tpu.memory_space<vmem>>, %arg9: memref<1x128xf32, #tpu.memory_space<vmem>>, %arg10: memref<64x128xbf16, #tpu.memory_space<vmem>>) attributes {dimension_semantics = [#tpu.dimension_semantics<parallel>], iteration_bounds = array<i64: 1>, scalar_prefetch = 0 : i64, scratch_operands = 0 : i64, tpu.core_type = #tpu.core_type<tc>, window_params = [{transform_indices = @transform_0, window_bounds = array<i64: 64, 204>}, {pipeline_mode = #tpu.pipeline_mode<synchronous>, transform_indices = @transform_1, window_bounds = array<i64: 204, 512>}, {pipeline_mode = #tpu.pipeline_mode<synchronous>, transform_indices = @transform_2, window_bounds = array<i64: 1, 512>}, {pipeline_mode = #tpu.pipeline_mode<synchronous>, transform_indices = @transform_3, window_bounds = array<i64: 512, 256>}, {pipeline_mode = #tpu.pipeline_mode<synchronous>, transform_indices = @transform_4, window_bounds = array<i64: 1, 256>}, {pipeline_mode = #tpu.pipeline_mode<synchronous>, transform_indices = @transform_5, window_bounds = array<i64: 256, 128>}, {pipeline_mode = #tpu.pipeline_mode<synchronous>, transform_indices = @transform_6, window_bounds = array<i64: 1, 128>}, {pipeline_mode = #tpu.pipeline_mode<synchronous>, transform_indices = @transform_7, window_bounds = array<i64: 128, 128>}, {pipeline_mode = #tpu.pipeline_mode<synchronous>, transform_indices = @transform_8, window_bounds = array<i64: 1, 128>}, {transform_indices = @transform_9, window_bounds = array<i64: 64, 128>}]} {
    %c0 = arith.constant 0 : index
    %c0_0 = arith.constant 0 : index
    %0 = vector.load %arg1[%c0, %c0_0] : memref<64x204xf32, #tpu.memory_space<vmem>>, vector<64x204xf32>
    %1 = arith.truncf %0 : vector<64x204xf32> to vector<64x204xbf16>
    %c0_1 = arith.constant 0 : index
    %c0_2 = arith.constant 0 : index
    %2 = vector.load %arg2[%c0_1, %c0_2] : memref<204x512xbf16, #tpu.memory_space<vmem>>, vector<204x512xbf16>
    %cst = arith.constant dense<0.000000e+00> : vector<64x512xf32>
    %3 = tpu.matmul %1, %2, %cst {dimension_numbers = #tpu.dot_dimension_numbers<[1], [0], [0], [1], [0, 0, 1, 1], [], []>} : vector<64x204xbf16>, vector<204x512xbf16>, vector<64x512xf32> -> vector<64x512xf32>
    %c0_3 = arith.constant 0 : index
    %c0_4 = arith.constant 0 : index
    %4 = vector.load %arg3[%c0_3, %c0_4] : memref<1x512xf32, #tpu.memory_space<vmem>>, vector<1x512xf32>
    %5 = vector.broadcast %4 : vector<1x512xf32> to vector<64x512xf32>
    %6 = arith.addf %3, %5 : vector<64x512xf32>
    %cst_5 = arith.constant 0.000000e+00 : f32
    %7 = vector.broadcast %cst_5 : f32 to vector<64x512xf32>
    %8 = arith.maximumf %6, %7 : vector<64x512xf32>
    %9 = arith.truncf %8 : vector<64x512xf32> to vector<64x512xbf16>
    %c0_6 = arith.constant 0 : index
    %c0_7 = arith.constant 0 : index
    %10 = vector.load %arg4[%c0_6, %c0_7] : memref<512x256xbf16, #tpu.memory_space<vmem>>, vector<512x256xbf16>
    %cst_8 = arith.constant dense<0.000000e+00> : vector<64x256xf32>
    %11 = tpu.matmul %9, %10, %cst_8 {dimension_numbers = #tpu.dot_dimension_numbers<[1], [0], [0], [1], [0, 0, 1, 1], [], []>} : vector<64x512xbf16>, vector<512x256xbf16>, vector<64x256xf32> -> vector<64x256xf32>
    %c0_9 = arith.constant 0 : index
    %c0_10 = arith.constant 0 : index
    %12 = vector.load %arg5[%c0_9, %c0_10] : memref<1x256xf32, #tpu.memory_space<vmem>>, vector<1x256xf32>
    %13 = vector.broadcast %12 : vector<1x256xf32> to vector<64x256xf32>
    %14 = arith.addf %11, %13 : vector<64x256xf32>
    %cst_11 = arith.constant 0.000000e+00 : f32
    %15 = vector.broadcast %cst_11 : f32 to vector<64x256xf32>
    %16 = arith.maximumf %14, %15 : vector<64x256xf32>
    %17 = arith.truncf %16 : vector<64x256xf32> to vector<64x256xbf16>
    %c0_12 = arith.constant 0 : index
    %c0_13 = arith.constant 0 : index
    %18 = vector.load %arg6[%c0_12, %c0_13] : memref<256x128xbf16, #tpu.memory_space<vmem>>, vector<256x128xbf16>
    %cst_14 = arith.constant dense<0.000000e+00> : vector<64x128xf32>
    %19 = tpu.matmul %17, %18, %cst_14 {dimension_numbers = #tpu.dot_dimension_numbers<[1], [0], [0], [1], [0, 0, 1, 1], [], []>} : vector<64x256xbf16>, vector<256x128xbf16>, vector<64x128xf32> -> vector<64x128xf32>
    %c0_15 = arith.constant 0 : index
    %c0_16 = arith.constant 0 : index
    %20 = vector.load %arg7[%c0_15, %c0_16] : memref<1x128xf32, #tpu.memory_space<vmem>>, vector<1x128xf32>
    %21 = vector.broadcast %20 : vector<1x128xf32> to vector<64x128xf32>
    %22 = arith.addf %19, %21 : vector<64x128xf32>
    %cst_17 = arith.constant 0.000000e+00 : f32
    %23 = vector.broadcast %cst_17 : f32 to vector<64x128xf32>
    %24 = arith.maximumf %22, %23 : vector<64x128xf32>
    %25 = arith.truncf %24 : vector<64x128xf32> to vector<64x128xbf16>
    %c0_18 = arith.constant 0 : index
    %c0_19 = arith.constant 0 : index
    %26 = vector.load %arg8[%c0_18, %c0_19] : memref<128x128xbf16, #tpu.memory_space<vmem>>, vector<128x128xbf16>
    %cst_20 = arith.constant dense<0.000000e+00> : vector<64x128xf32>
    %27 = tpu.matmul %25, %26, %cst_20 {dimension_numbers = #tpu.dot_dimension_numbers<[1], [0], [0], [1], [0, 0, 1, 1], [], []>} : vector<64x128xbf16>, vector<128x128xbf16>, vector<64x128xf32> -> vector<64x128xf32>
    %c0_21 = arith.constant 0 : index
    %c0_22 = arith.constant 0 : index
    %28 = vector.load %arg9[%c0_21, %c0_22] : memref<1x128xf32, #tpu.memory_space<vmem>>, vector<1x128xf32>
    %29 = vector.broadcast %28 : vector<1x128xf32> to vector<64x128xf32>
    %30 = arith.addf %27, %29 : vector<64x128xf32>
    %31 = arith.truncf %30 : vector<64x128xf32> to vector<64x128xbf16>
    %c0_23 = arith.constant 0 : index
    %c0_24 = arith.constant 0 : index
    %32 = vector.load %arg10[%c0_23, %c0_24] : memref<64x128xbf16, #tpu.memory_space<vmem>>, vector<64x128xbf16>
    tpu.vector_store %arg10[%c0_23, %c0_24], %31 {strides = array<i32>} : memref<64x128xbf16, #tpu.memory_space<vmem>>, vector<64x128xbf16>,
    return
  }
  func.func @transform_0(%arg0: i32) -> (i32, i32) {
    %c0_i32 = arith.constant 0 : i32
    %c0_i32_0 = arith.constant 0 : i32
    return %arg0, %c0_i32 : i32, i32
  }
  func.func @transform_1(%arg0: i32) -> (i32, i32) {
    %c0_i32 = arith.constant 0 : i32
    %c0_i32_0 = arith.constant 0 : i32
    %c0_i32_1 = arith.constant 0 : i32
    return %c0_i32, %c0_i32_0 : i32, i32
  }
  func.func @transform_2(%arg0: i32) -> (i32, i32) {
    %c0_i32 = arith.constant 0 : i32
    %c0_i32_0 = arith.constant 0 : i32
    %c0_i32_1 = arith.constant 0 : i32
    return %c0_i32, %c0_i32_0 : i32, i32
  }
  func.func @transform_3(%arg0: i32) -> (i32, i32) {
    %c0_i32 = arith.constant 0 : i32
    %c0_i32_0 = arith.constant 0 : i32
    %c0_i32_1 = arith.constant 0 : i32
    return %c0_i32, %c0_i32_0 : i32, i32
  }
  func.func @transform_4(%arg0: i32) -> (i32, i32) {
    %c0_i32 = arith.constant 0 : i32
    %c0_i32_0 = arith.constant 0 : i32
    %c0_i32_1 = arith.constant 0 : i32
    return %c0_i32, %c0_i32_0 : i32, i32
  }
  func.func @transform_5(%arg0: i32) -> (i32, i32) {
    %c0_i32 = arith.constant 0 : i32
    %c0_i32_0 = arith.constant 0 : i32
    %c0_i32_1 = arith.constant 0 : i32
    return %c0_i32, %c0_i32_0 : i32, i32
  }
  func.func @transform_6(%arg0: i32) -> (i32, i32) {
    %c0_i32 = arith.constant 0 : i32
    %c0_i32_0 = arith.constant 0 : i32
    %c0_i32_1 = arith.constant 0 : i32
    return %c0_i32, %c0_i32_0 : i32, i32
  }
  func.func @transform_7(%arg0: i32) -> (i32, i32) {
    %c0_i32 = arith.constant 0 : i32
    %c0_i32_0 = arith.constant 0 : i32
    %c0_i32_1 = arith.constant 0 : i32
    return %c0_i32, %c0_i32_0 : i32, i32
  }
  func.func @transform_8(%arg0: i32) -> (i32, i32) {
    %c0_i32 = arith.constant 0 : i32
    %c0_i32_0 = arith.constant 0 : i32
    %c0_i32_1 = arith.constant 0 : i32
    return %c0_i32, %c0_i32_0 : i32, i32
  }
  func.func @transform_9(%arg0: i32) -> (i32, i32) {
    %c0_i32 = arith.constant 0 : i32
    %c0_i32_0 = arith.constant 0 : i32
    return %arg0, %c0_i32 : i32, i32
  }
}

</mosaic_0001>

<llo_original>
// kernel: mlp_forward.1
$region0: #{mlp_forward.1}
  #allocation0 [shape = 'u32[]', space=smem, size = 0x4, offset = 0x4, fixed_abs, tag = 'smem constant byte address 0x4 - core index']
  #allocation1 [shape = 'u32[72,128]{1,0:T(1,128)}', space=vmem, size = 0x9000, scoped, tag = 'internal scratch']
  %s0 = inlined_call_operand.hbm [shape: f32[64,204], index: 0, kind: input, shape index: {}]
  %s1 = inlined_call_operand.hbm [shape: bf16[204,512], index: 1, kind: input, shape index: {}]
  %s2 = inlined_call_operand.hbm [shape: f32[1,512], index: 2, kind: input, shape index: {}]
  %s3 = inlined_call_operand.hbm [shape: bf16[512,256], index: 3, kind: input, shape index: {}]
  %s4 = inlined_call_operand.vmem [shape: f32[1,256], index: 4, kind: input, shape index: {}]
  %s5 = inlined_call_operand.hbm [shape: bf16[256,128], index: 5, kind: input, shape index: {}]
  %s6 = inlined_call_operand.vmem [shape: f32[1,128], index: 6, kind: input, shape index: {}]
  %s7 = inlined_call_operand.hbm [shape: bf16[128,128], index: 7, kind: input, shape index: {}]
  %s8 = inlined_call_operand.vmem [shape: f32[1,128], index: 8, kind: input, shape index: {}]
  %s9 = inlined_call_operand.vmem [shape: bf16[64,128], index: 9, kind: output, shape index: {}]
  %s10 = sld [smem:[#allocation0]]
  $region70: #{mlp_forward.1} parent=0
    _
  %s12 = ssub.s32 1, %s10
  %s13 = scalar_select 0, %s12, %s10
  $region1: #{mlp_forward.1} parent=0
    #allocation2 [shape = 'u8[65536]{0}', space=vmem, size = 0x10000, scoped, tag = 'input window, operand 0, single buffered']
    #allocation3 [shape = 's32[1]{0}', space=sflag, size = 0x4, scoped, tag = 'scoped memory for mlp_forward.1']
    #allocation4 [shape = 'u8[212992]{0}', space=vmem, size = 0x34000, scoped, tag = 'input window, operand 1, single buffered']
    #allocation5 [shape = 's32[1]{0}', space=sflag, size = 0x4, scoped, tag = 'scoped memory for mlp_forward.1']
    #allocation6 [shape = 'u8[2048]{0}', space=vmem, size = 0x800, scoped, tag = 'input window, operand 2, single buffered']
    #allocation7 [shape = 'u8[262144]{0}', space=vmem, size = 0x40000, scoped, tag = 'input window, operand 3, single buffered']
    #allocation8 [shape = 's32[1]{0}', space=sflag, size = 0x4, scoped, tag = 'scoped memory for mlp_forward.1']
    #allocation9 [shape = 'u8[65536]{0}', space=vmem, size = 0x10000, scoped, tag = 'input window, operand 5, single buffered']
    #allocation10 [shape = 'u8[32768]{0}', space=vmem, size = 0x8000, scoped, tag = 'input window, operand 7, single buffered']
    #allocation11 [shape = 's32[1]{0}', space=sflag, size = 0x4, scoped, tag = 'scoped memory for mlp_forward.1']
    %14 = vsyncpa [#allocation3], 0
    %15 = vsyncpa [#allocation5], 0
    %16 = vsyncpa [#allocation8], 0
    %17 = vsyncpa [#allocation11], 0
    // Predicated region
    $region2: #{mlp_forward.1} parent=1 // pred_check
      _
    $region3: #{mlp_forward.1} parent=1 // pred_check_branch
      %19 = sbr.rel (0) target = $region5
    $region4: #{mlp_forward.1} parent=1 // pred_region
      %21 = vsyncadd [#allocation3], 0
      %s22 = sshll.u32 %s0, 4
      %s23 = int_to_ptr.hbm [resolvable:$true] %s22
      %s24 = sshll.u32 [#allocation2], 4
      %s25 = int_to_ptr.vmem [resolvable:$true] %s24
      %30 = dma.hbm_to_vmem [thread:$0]  %s23, 2048, %s25, [#allocation3], 256, 256, 16
    $region5: #{mlp_forward.1} parent=1 // pred_fallthru
      _
    // Predicated region
    $region6: #{mlp_forward.1} parent=1 // pred_check
      _
    $region7: #{mlp_forward.1} parent=1 // pred_check_branch
      %32 = sbr.rel (0) target = $region9
    $region8: #{mlp_forward.1} parent=1 // pred_region
      %34 = vsyncadd [#allocation5], 0
      %s35 = sshll.u32 %s1, 4
      %s36 = int_to_ptr.hbm [resolvable:$true] %s35
      %s37 = sshll.u32 [#allocation4], 4
      %s38 = int_to_ptr.vmem [resolvable:$true] %s37
      %43 = dma.hbm_to_vmem [thread:$0]  %s36, 6656, %s38, [#allocation5], 256, 256, 16
    $region9: #{mlp_forward.1} parent=1 // pred_fallthru
      _
    // Predicated region
    $region10: #{mlp_forward.1} parent=1 // pred_check
      _
    $region11: #{mlp_forward.1} parent=1 // pred_check_branch
      %45 = sbr.rel (0) target = $region13
    $region12: #{mlp_forward.1} parent=1 // pred_region
      %47 = vsyncadd [#allocation5], 0
      %s49 = sshll.u32 %s2, 4
      %s50 = int_to_ptr.hbm [resolvable:$true] %s49
      %s51 = sshll.u32 [#allocation6], 4
      %s52 = int_to_ptr.vmem [resolvable:$true] %s51
      %54 = dma.hbm_to_vmem [thread:$0]  %s50, 64, %s52, [#allocation5]
    $region13: #{mlp_forward.1} parent=1 // pred_fallthru
      _
    // Predicated region
    $region14: #{mlp_forward.1} parent=1 // pred_check
      _
    $region15: #{mlp_forward.1} parent=1 // pred_check_branch
      %56 = sbr.rel (0) target = $region17
    $region16: #{mlp_forward.1} parent=1 // pred_region
      %58 = vsyncadd [#allocation8], 0
      %s59 = sshll.u32 %s3, 4
      %s60 = int_to_ptr.hbm [resolvable:$true] %s59
      %s61 = sshll.u32 [#allocation7], 4
      %s62 = int_to_ptr.vmem [resolvable:$true] %s61
      %67 = dma.hbm_to_vmem [thread:$0]  %s60, 8192, %s62, [#allocation8], 128, 128, 8
    $region17: #{mlp_forward.1} parent=1 // pred_fallthru
      _
    // Predicated region
    $region18: #{mlp_forward.1} parent=1 // pred_check
      _
    $region19: #{mlp_forward.1} parent=1 // pred_check_branch
      %69 = sbr.rel (0) target = $region21
    $region20: #{mlp_forward.1} parent=1 // pred_region
      _
    $region21: #{mlp_forward.1} parent=1 // pred_fallthru
      _
    // Predicated region
    $region22: #{mlp_forward.1} parent=1 // pred_check
      _
    $region23: #{mlp_forward.1} parent=1 // pred_check_branch
      %71 = sbr.rel (0) target = $region25
    $region24: #{mlp_forward.1} parent=1 // pred_region
      %73 = vsyncadd [#allocation8], 0
      %s74 = sshll.u32 %s5, 4
      %s75 = int_to_ptr.hbm [resolvable:$true] %s74
      %s76 = sshll.u32 [#allocation9], 4
      %s77 = int_to_ptr.vmem [resolvable:$true] %s76
      %82 = dma.hbm_to_vmem [thread:$0]  %s75, 2048, %s77, [#allocation8], 64, 64, 4
    $region25: #{mlp_forward.1} parent=1 // pred_fallthru
      _
    // Predicated region
    $region26: #{mlp_forward.1} parent=1 // pred_check
      _
    $region27: #{mlp_forward.1} parent=1 // pred_check_branch
      %84 = sbr.rel (0) target = $region29
    $region28: #{mlp_forward.1} parent=1 // pred_region
      _
    $region29: #{mlp_forward.1} parent=1 // pred_fallthru
      _
    // Predicated region
    $region30: #{mlp_forward.1} parent=1 // pred_check
      _
    $region31: #{mlp_forward.1} parent=1 // pred_check_branch
      %86 = sbr.rel (0) target = $region33
    $region32: #{mlp_forward.1} parent=1 // pred_region
      %88 = vsyncadd [#allocation11], 0
      %s89 = sshll.u32 %s7, 4
      %s90 = int_to_ptr.hbm [resolvable:$true] %s89
      %s91 = sshll.u32 [#allocation10], 4
      %s92 = int_to_ptr.vmem [resolvable:$true] %s91
      %97 = dma.hbm_to_vmem [thread:$0]  %s90, 1024, %s92, [#allocation11], 64, 64, 4
    $region33: #{mlp_forward.1} parent=1 // pred_fallthru
      _
    // Predicated region
    $region34: #{mlp_forward.1} parent=1 // pred_check
      _
    $region35: #{mlp_forward.1} parent=1 // pred_check_branch
      %99 = sbr.rel (0) target = $region37
    $region36: #{mlp_forward.1} parent=1 // pred_region
      _
    $region37: #{mlp_forward.1} parent=1 // pred_fallthru
      _
    // Predicated region
    $region38: #{mlp_forward.1} parent=1 // pred_check
      _
    $region39: #{mlp_forward.1} parent=1 // pred_check_branch
      %101 = sbr.rel (0) target = $region41
    $region40: #{mlp_forward.1} parent=1 // pred_region
      %103 = dma.done [#allocation3], 2048
    $region41: #{mlp_forward.1} parent=1 // pred_fallthru
      _
    // Predicated region
    $region42: #{mlp_forward.1} parent=1 // pred_check
      _
    $region43: #{mlp_forward.1} parent=1 // pred_check_branch
      %105 = sbr.rel (0) target = $region45
    $region44: #{mlp_forward.1} parent=1 // pred_region
      %107 = dma.done [#allocation5], 6656
    $region45: #{mlp_forward.1} parent=1 // pred_fallthru
      _
    // Predicated region
    $region46: #{mlp_forward.1} parent=1 // pred_check
      _
    $region47: #{mlp_forward.1} parent=1 // pred_check_branch
      %109 = sbr.rel (0) target = $region49
    $region48: #{mlp_forward.1} parent=1 // pred_region
      %111 = dma.done [#allocation5], 64
    $region49: #{mlp_forward.1} parent=1 // pred_fallthru
      _
    // Predicated region
    $region50: #{mlp_forward.1} parent=1 // pred_check
      _
    $region51: #{mlp_forward.1} parent=1 // pred_check_branch
      %113 = sbr.rel (0) target = $region53
    $region52: #{mlp_forward.1} parent=1 // pred_region
      %115 = dma.done [#allocation8], 8192
    $region53: #{mlp_forward.1} parent=1 // pred_fallthru
      _
    // Predicated region
    $region54: #{mlp_forward.1} parent=1 // pred_check
      _
    $region55: #{mlp_forward.1} parent=1 // pred_check_branch
      %117 = sbr.rel (0) target = $region57
    $region56: #{mlp_forward.1} parent=1 // pred_region
      %119 = dma.done [#allocation8], 2048
    $region57: #{mlp_forward.1} parent=1 // pred_fallthru
      _
    // Predicated region
    $region58: #{mlp_forward.1} parent=1 // pred_check
      _
    $region59: #{mlp_forward.1} parent=1 // pred_check_branch
      %121 = sbr.rel (0) target = $region61
    $region60: #{mlp_forward.1} parent=1 // pred_region
      %123 = dma.done [#allocation11], 1024
    $region61: #{mlp_forward.1} parent=1 // pred_fallthru
      _
    %v125 = vld [vmem:[#allocation2] sm:$0xff]
    %v126 = vld [vmem:[#allocation2 + $0x8] sm:$0xff]
    %v127 = vld [vmem:[#allocation2 + $0x10] sm:$0xff]
    %v128 = vld [vmem:[#allocation2 + $0x18] sm:$0xff]
    %v129 = vld [vmem:[#allocation2 + $0x20] sm:$0xff]
    %v130 = vld [vmem:[#allocation2 + $0x28] sm:$0xff]
    %v131 = vld [vmem:[#allocation2 + $0x30] sm:$0xff]
    %v132 = vld [vmem:[#allocation2 + $0x38] sm:$0xff]
    %v133 = vld [vmem:[#allocation2 + $0x40] sm:$0xff]
    %v134 = vld [vmem:[#allocation2 + $0x48] sm:$0xff]
    %v135 = vld [vmem:[#allocation2 + $0x50] sm:$0xff]
    %v136 = vld [vmem:[#allocation2 + $0x58] sm:$0xff]
    %v137 = vld [vmem:[#allocation2 + $0x60] sm:$0xff]
    %v138 = vld [vmem:[#allocation2 + $0x68] sm:$0xff]
    %v139 = vld [vmem:[#allocation2 + $0x70] sm:$0xff]
    %v140 = vld [vmem:[#allocation2 + $0x78] sm:$0xff]
    %v141 = vpack.c.bf16 %v127, %v125
    %v142 = vpack.c.bf16 %v128, %v126
    %v143 = vpack.c.bf16 %v131, %v129
    %v144 = vpack.c.bf16 %v132, %v130
    %v145 = vpack.c.bf16 %v135, %v133
    %v146 = vpack.c.bf16 %v136, %v134
    %v147 = vpack.c.bf16 %v139, %v137
    %v148 = vpack.c.bf16 %v140, %v138
    %v149 = vld [vmem:[#allocation4] sm:$0xff]
    %v150 = vld [vmem:[#allocation4 + $0x8] sm:$0xff]
    %v151 = vld [vmem:[#allocation4 + $0x10] sm:$0xff]
    %v152 = vld [vmem:[#allocation4 + $0x18] sm:$0xff]
    %v153 = vld [vmem:[#allocation4 + $0x20] sm:$0xff]
    %v154 = vld [vmem:[#allocation4 + $0x28] sm:$0xff]
    %v155 = vld [vmem:[#allocation4 + $0x30] sm:$0xff]
    %v156 = vld [vmem:[#allocation4 + $0x38] sm:$0xff]
    %v157 = vld [vmem:[#allocation4 + $0x40] sm:$0xff]
    %v158 = vld [vmem:[#allocation4 + $0x48] sm:$0xff]
    %v159 = vld [vmem:[#allocation4 + $0x50] sm:$0xff]
    %v160 = vld [vmem:[#allocation4 + $0x58] sm:$0xff]
    %v161 = vld [vmem:[#allocation4 + $0x60] sm:$0xff]
    %v162 = vld [vmem:[#allocation4 + $0x68] sm:$0xff]
    %v163 = vld [vmem:[#allocation4 + $0x70] sm:$0xff]
    %v164 = vld [vmem:[#allocation4 + $0x78] sm:$0xff]
    %v165 = vld [vmem:[#allocation4 + $0x80] sm:$0xff]
    %v166 = vld [vmem:[#allocation4 + $0x88] sm:$0xff]
    %v167 = vld [vmem:[#allocation4 + $0x90] sm:$0xff]
    %v168 = vld [vmem:[#allocation4 + $0x98] sm:$0xff]
    %v169 = vld [vmem:[#allocation4 + $0xa0] sm:$0xff]
    %v170 = vld [vmem:[#allocation4 + $0xa8] sm:$0xff]
    %v171 = vld [vmem:[#allocation4 + $0xb0] sm:$0xff]
    %v172 = vld [vmem:[#allocation4 + $0xb8] sm:$0xff]
    %v173 = vld [vmem:[#allocation4 + $0xc0] sm:$0xff]
    %v174 = vld [vmem:[#allocation4 + $0xc8] sm:$0xff]
    %v175 = vld [vmem:[#allocation4 + $0xd0] sm:$0xff]
    %v176 = vld [vmem:[#allocation4 + $0xd8] sm:$0xff]
    %v177 = vld [vmem:[#allocation4 + $0xe0] sm:$0xff]
    %v178 = vld [vmem:[#allocation4 + $0xe8] sm:$0xff]
    %v179 = vld [vmem:[#allocation4 + $0xf0] sm:$0xff]
    %v180 = vld [vmem:[#allocation4 + $0xf8] sm:$0xff]
    %v181 = vld [vmem:[#allocation4 + $0x100] sm:$0xff]
    %v182 = vld [vmem:[#allocation4 + $0x108] sm:$0xff]
    %v183 = vld [vmem:[#allocation4 + $0x110] sm:$0xff]
    %v184 = vld [vmem:[#allocation4 + $0x118] sm:$0xff]
    %v185 = vld [vmem:[#allocation4 + $0x120] sm:$0xff]
    %v186 = vld [vmem:[#allocation4 + $0x128] sm:$0xff]
    %v187 = vld [vmem:[#allocation4 + $0x130] sm:$0xff]
    %v188 = vld [vmem:[#allocation4 + $0x138] sm:$0xff]
    %v189 = vld [vmem:[#allocation4 + $0x140] sm:$0xff]
    %v190 = vld [vmem:[#allocation4 + $0x148] sm:$0xff]
    %v191 = vld [vmem:[#allocation4 + $0x150] sm:$0xff]
    %v192 = vld [vmem:[#allocation4 + $0x158] sm:$0xff]
    %v193 = vld [vmem:[#allocation4 + $0x160] sm:$0xff]
    %v194 = vld [vmem:[#allocation4 + $0x168] sm:$0xff]
    %v195 = vld [vmem:[#allocation4 + $0x170] sm:$0xff]
    %v196 = vld [vmem:[#allocation4 + $0x178] sm:$0xff]
    %v197 = vld [vmem:[#allocation4 + $0x180] sm:$0xff]
    %v198 = vld [vmem:[#allocation4 + $0x188] sm:$0xff]
    %v199 = vld [vmem:[#allocation4 + $0x190] sm:$0x33]
    %v200 = vld [vmem:[#allocation4 + $0x198] sm:$0x33]
    %v201 = vld [vmem:[#allocation6] sm:$0xf]
    %v203 = vperm.slane %v201, 0
    %v204 = vperm.slane %v201, 1
    %v205 = vperm.slane %v201, 2
    %v206 = vperm.slane %v201, 3
    %v263 = vunpack.c.l.b16 %v149
    %v264 = vunpack.c.h.b16 %v149
    %v265 = vunpack.c.l.b16 %v150
    %v266 = vunpack.c.h.b16 %v150
    %v267 = vunpack.c.l.b16 %v151
    %v268 = vunpack.c.h.b16 %v151
    %v269 = vunpack.c.l.b16 %v152
    %v270 = vunpack.c.h.b16 %v152
    %v271 = vunpack.c.l.b16 %v153
    %v272 = vunpack.c.h.b16 %v153
    %v273 = vunpack.c.l.b16 %v154
    %v274 = vunpack.c.h.b16 %v154
    %v275 = vunpack.c.l.b16 %v155
    %v276 = vunpack.c.h.b16 %v155
    %v277 = vunpack.c.l.b16 %v156
    %v278 = vunpack.c.h.b16 %v156
    %v279 = vunpack.c.l.b16 %v157
    %v280 = vunpack.c.h.b16 %v157
    %v281 = vunpack.c.l.b16 %v158
    %v282 = vunpack.c.h.b16 %v158
    %v283 = vunpack.c.l.b16 %v159
    %v284 = vunpack.c.h.b16 %v159
    %v285 = vunpack.c.l.b16 %v160
    %v286 = vunpack.c.h.b16 %v160
    %v287 = vunpack.c.l.b16 %v161
    %v288 = vunpack.c.h.b16 %v161
    %v289 = vunpack.c.l.b16 %v162
    %v290 = vunpack.c.h.b16 %v162
    %v291 = vunpack.c.l.b16 %v163
    %v292 = vunpack.c.h.b16 %v163
    %v293 = vunpack.c.l.b16 %v164
    %v294 = vunpack.c.h.b16 %v164
    %v295 = vunpack.c.l.b16 %v165
    %v296 = vunpack.c.h.b16 %v165
    %v297 = vunpack.c.l.b16 %v166
    %v298 = vunpack.c.h.b16 %v166
    %v299 = vunpack.c.l.b16 %v167
    %v300 = vunpack.c.h.b16 %v167
    %v301 = vunpack.c.l.b16 %v168
    %v302 = vunpack.c.h.b16 %v168
    %v303 = vunpack.c.l.b16 %v169
    %v304 = vunpack.c.h.b16 %v169
    %v305 = vunpack.c.l.b16 %v170
    %v306 = vunpack.c.h.b16 %v170
    %v307 = vunpack.c.l.b16 %v171
    %v308 = vunpack.c.h.b16 %v171
    %v309 = vunpack.c.l.b16 %v172
    %v310 = vunpack.c.h.b16 %v172
    %v311 = vunpack.c.l.b16 %v173
    %v312 = vunpack.c.h.b16 %v173
    %v313 = vunpack.c.l.b16 %v174
    %v314 = vunpack.c.h.b16 %v174
    %v315 = vunpack.c.l.b16 %v175
    %v316 = vunpack.c.h.b16 %v175
    %v317 = vunpack.c.l.b16 %v176
    %v318 = vunpack.c.h.b16 %v176
    %v319 = vunpack.c.l.b16 %v177
    %v320 = vunpack.c.h.b16 %v177
    %v321 = vunpack.c.l.b16 %v178
    %v322 = vunpack.c.h.b16 %v178
    %v323 = vunpack.c.l.b16 %v179
    %v324 = vunpack.c.h.b16 %v179
    %v325 = vunpack.c.l.b16 %v180
    %v326 = vunpack.c.h.b16 %v180
    %v327 = vunpack.c.l.b16 %v181
    %v328 = vunpack.c.h.b16 %v181
    %v329 = vunpack.c.l.b16 %v182
    %v330 = vunpack.c.h.b16 %v182
    %v331 = vunpack.c.l.b16 %v183
    %v332 = vunpack.c.h.b16 %v183
    %v333 = vunpack.c.l.b16 %v184
    %v334 = vunpack.c.h.b16 %v184
    %v335 = vunpack.c.l.b16 %v185
    %v336 = vunpack.c.h.b16 %v185
    %v337 = vunpack.c.l.b16 %v186
    %v338 = vunpack.c.h.b16 %v186
    %v339 = vunpack.c.l.b16 %v187
    %v340 = vunpack.c.h.b16 %v187
    %v341 = vunpack.c.l.b16 %v188
    %v342 = vunpack.c.h.b16 %v188
    %v343 = vunpack.c.l.b16 %v189
    %v344 = vunpack.c.h.b16 %v189
    %v345 = vunpack.c.l.b16 %v190
    %v346 = vunpack.c.h.b16 %v190
    %v347 = vunpack.c.l.b16 %v191
    %v348 = vunpack.c.h.b16 %v191
    %v349 = vunpack.c.l.b16 %v192
    %v350 = vunpack.c.h.b16 %v192
    %v351 = vunpack.c.l.b16 %v193
    %v352 = vunpack.c.h.b16 %v193
    %v353 = vunpack.c.l.b16 %v194
    %v354 = vunpack.c.h.b16 %v194
    %v355 = vunpack.c.l.b16 %v195
    %v356 = vunpack.c.h.b16 %v195
    %v357 = vunpack.c.l.b16 %v196
    %v358 = vunpack.c.h.b16 %v196
    %v359 = vunpack.c.l.b16 %v197
    %v360 = vunpack.c.h.b16 %v197
    %v361 = vunpack.c.l.b16 %v198
    %v362 = vunpack.c.h.b16 %v198
    %v363 = vunpack.c.l.b16 %v199
    %v364 = vunpack.c.h.b16 %v199
    %v365 = vunpack.c.l.b16 %v200
    %v366 = vunpack.c.h.b16 %v200
    %v367 = vpack.c.b16 %v267, %v263
    %v368 = vpack.c.b16 %v268, %v264
    %v369 = vpack.c.b16 %v269, %v265
    %v370 = vpack.c.b16 %v270, %v266
    %v371 = vpack.c.b16 %v275, %v271
    %v372 = vpack.c.b16 %v276, %v272
    %v373 = vpack.c.b16 %v277, %v273
    %v374 = vpack.c.b16 %v278, %v274
    %v375 = vpack.c.b16 %v283, %v279
    %v376 = vpack.c.b16 %v284, %v280
    %v377 = vpack.c.b16 %v285, %v281
    %v378 = vpack.c.b16 %v286, %v282
    %v379 = vpack.c.b16 %v291, %v287
    %v380 = vpack.c.b16 %v292, %v288
    %v381 = vpack.c.b16 %v293, %v289
    %v382 = vpack.c.b16 %v294, %v290
    %v383 = vpack.c.b16 %v299, %v295
    %v384 = vpack.c.b16 %v300, %v296
    %v385 = vpack.c.b16 %v301, %v297
    %v386 = vpack.c.b16 %v302, %v298
    %v387 = vpack.c.b16 %v307, %v303
    %v388 = vpack.c.b16 %v308, %v304
    %v389 = vpack.c.b16 %v309, %v305
    %v390 = vpack.c.b16 %v310, %v306
    %v391 = vpack.c.b16 %v315, %v311
    %v392 = vpack.c.b16 %v316, %v312
    %v393 = vpack.c.b16 %v317, %v313
    %v394 = vpack.c.b16 %v318, %v314
    %v395 = vpack.c.b16 %v323, %v319
    %v396 = vpack.c.b16 %v324, %v320
    %v397 = vpack.c.b16 %v325, %v321
    %v398 = vpack.c.b16 %v326, %v322
    %v399 = vpack.c.b16 %v331, %v327
    %v400 = vpack.c.b16 %v332, %v328
    %v401 = vpack.c.b16 %v333, %v329
    %v402 = vpack.c.b16 %v334, %v330
    %v403 = vpack.c.b16 %v339, %v335
    %v404 = vpack.c.b16 %v340, %v336
    %v405 = vpack.c.b16 %v341, %v337
    %v406 = vpack.c.b16 %v342, %v338
    %v407 = vpack.c.b16 %v347, %v343
    %v408 = vpack.c.b16 %v348, %v344
    %v409 = vpack.c.b16 %v349, %v345
    %v410 = vpack.c.b16 %v350, %v346
    %v411 = vpack.c.b16 %v355, %v351
    %v412 = vpack.c.b16 %v356, %v352
    %v413 = vpack.c.b16 %v357, %v353
    %v414 = vpack.c.b16 %v358, %v354
    %v415 = vpack.c.b16 %v363, %v359
    %v416 = vpack.c.b16 %v364, %v360
    %v417 = vpack.c.b16 %v365, %v361
    %v418 = vpack.c.b16 %v366, %v362
    %vm467 = vcmask 621568
    %v469 = vsel %vm467, %v142, 0
    %v472 = vsel %vm467, %v144, 0
    %v475 = vsel %vm467, %v146, 0
    %v478 = vsel %vm467, %v148, 0
    %vm480 = vcmask 1045504
    %v482 = vsel %vm480, %v415, 0
    %v485 = vsel %vm480, %v416, 0
    %v488 = vsel %vm480, %v417, 0
    %v491 = vsel %vm480, %v418, 0
    %493 = vmatpush.bf16.msra.mxu0 %v395
    %494 = vmatpush.bf16.msra.mxu0 %v391
    %495 = vmatpush.bf16.msra.mxu0 %v387
    %496 = vmatpush.bf16.msra.mxu0 %v383
    %497 = vmatpush.bf16.msra.mxu0 %v379
    %498 = vmatpush.bf16.msra.mxu0 %v375
    %499 = vmatpush.bf16.msra.mxu0 %v371
    %500 = vmatpush.bf16.msra.mxu0 %v367
    %501 = vmatmul.bf16.gmra.mxu0 %v141
    %v502 = vpop.f32.mrf.mxu0
    %v503 = vadd.f32 %v203, %v502
    %v504 = vpop.f32.mrf.mxu0
    %v505 = vadd.f32 %v203, %v504
    %506 = vmatmul.bf16.gmra.mxu0 %v143
    %v507 = vpop.f32.mrf.mxu0
    %v508 = vadd.f32 %v203, %v507
    %v509 = vpop.f32.mrf.mxu0
    %v510 = vadd.f32 %v203, %v509
    %511 = vmatmul.bf16.gmra.mxu0 %v145
    %v512 = vpop.f32.mrf.mxu0
    %v513 = vadd.f32 %v203, %v512
    %v514 = vpop.f32.mrf.mxu0
    %v515 = vadd.f32 %v203, %v514
    %516 = vmatmul.bf16.gmra.mxu0 %v147
    %v517 = vpop.f32.mrf.mxu0
    %v518 = vadd.f32 %v203, %v517
    %v519 = vpop.f32.mrf.mxu0
    %v520 = vadd.f32 %v203, %v519
    %521 = vdwg.mxu0
    %522 = vmatpush.bf16.msra.mxu0 0
    %523 = vmatpush.bf16.msra.mxu0 0
    %524 = vmatpush.bf16.msra.mxu0 0
    %525 = vmatpush.bf16.msra.mxu0 %v482
    %526 = vmatpush.bf16.msra.mxu0 %v411
    %527 = vmatpush.bf16.msra.mxu0 %v407
    %528 = vmatpush.bf16.msra.mxu0 %v403
    %529 = vmatpush.bf16.msra.mxu0 %v399
    %530 = vmatmul.bf16.gmra.mxu0 %v469
    %v531 = vpop.f32.mrf.mxu0
    %v532 = vadd.f32 %v503, %v531
    %v533 = vpop.f32.mrf.mxu0
    %v534 = vadd.f32 %v505, %v533
    %535 = vmatmul.bf16.gmra.mxu0 %v472
    %v536 = vpop.f32.mrf.mxu0
    %v537 = vadd.f32 %v508, %v536
    %v538 = vpop.f32.mrf.mxu0
    %v539 = vadd.f32 %v510, %v538
    %540 = vmatmul.bf16.gmra.mxu0 %v475
    %v541 = vpop.f32.mrf.mxu0
    %v542 = vadd.f32 %v513, %v541
    %v543 = vpop.f32.mrf.mxu0
    %v544 = vadd.f32 %v515, %v543
    %545 = vmatmul.bf16.gmra.mxu0 %v478
    %v546 = vpop.f32.mrf.mxu0
    %v547 = vadd.f32 %v518, %v546
    %v548 = vpop.f32.mrf.mxu0
    %v549 = vadd.f32 %v520, %v548
    %550 = vdwg.mxu0
    %551 = vmatpush.bf16.msra.mxu0 %v396
    %552 = vmatpush.bf16.msra.mxu0 %v392
    %553 = vmatpush.bf16.msra.mxu0 %v388
    %554 = vmatpush.bf16.msra.mxu0 %v384
    %555 = vmatpush.bf16.msra.mxu0 %v380
    %556 = vmatpush.bf16.msra.mxu0 %v376
    %557 = vmatpush.bf16.msra.mxu0 %v372
    %558 = vmatpush.bf16.msra.mxu0 %v368
    %559 = vmatmul.bf16.gmra.mxu0 %v141
    %v560 = vpop.f32.mrf.mxu0
    %v561 = vadd.f32 %v204, %v560
    %v562 = vpop.f32.mrf.mxu0
    %v563 = vadd.f32 %v204, %v562
    %564 = vmatmul.bf16.gmra.mxu0 %v143
    %v565 = vpop.f32.mrf.mxu0
    %v566 = vadd.f32 %v204, %v565
    %v567 = vpop.f32.mrf.mxu0
    %v568 = vadd.f32 %v204, %v567
    %569 = vmatmul.bf16.gmra.mxu0 %v145
    %v570 = vpop.f32.mrf.mxu0
    %v571 = vadd.f32 %v204, %v570
    %v572 = vpop.f32.mrf.mxu0
    %v573 = vadd.f32 %v204, %v572
    %574 = vmatmul.bf16.gmra.mxu0 %v147
    %v575 = vpop.f32.mrf.mxu0
    %v576 = vadd.f32 %v204, %v575
    %v577 = vpop.f32.mrf.mxu0
    %v578 = vadd.f32 %v204, %v577
    %579 = vdwg.mxu0
    %580 = vmatpush.bf16.msra.mxu0 0
    %581 = vmatpush.bf16.msra.mxu0 0
    %582 = vmatpush.bf16.msra.mxu0 0
    %583 = vmatpush.bf16.msra.mxu0 %v485
    %584 = vmatpush.bf16.msra.mxu0 %v412
    %585 = vmatpush.bf16.msra.mxu0 %v408
    %586 = vmatpush.bf16.msra.mxu0 %v404
    %587 = vmatpush.bf16.msra.mxu0 %v400
    %588 = vmatmul.bf16.gmra.mxu0 %v469
    %v589 = vpop.f32.mrf.mxu0
    %v590 = vadd.f32 %v561, %v589
    %v591 = vpop.f32.mrf.mxu0
    %v592 = vadd.f32 %v563, %v591
    %593 = vmatmul.bf16.gmra.mxu0 %v472
    %v594 = vpop.f32.mrf.mxu0
    %v595 = vadd.f32 %v566, %v594
    %v596 = vpop.f32.mrf.mxu0
    %v597 = vadd.f32 %v568, %v596
    %598 = vmatmul.bf16.gmra.mxu0 %v475
    %v599 = vpop.f32.mrf.mxu0
    %v600 = vadd.f32 %v571, %v599
    %v601 = vpop.f32.mrf.mxu0
    %v602 = vadd.f32 %v573, %v601
    %603 = vmatmul.bf16.gmra.mxu0 %v478
    %v604 = vpop.f32.mrf.mxu0
    %v605 = vadd.f32 %v576, %v604
    %v606 = vpop.f32.mrf.mxu0
    %v607 = vadd.f32 %v578, %v606
    %608 = vdwg.mxu0
    %609 = vmatpush.bf16.msra.mxu0 %v397
    %610 = vmatpush.bf16.msra.mxu0 %v393
    %611 = vmatpush.bf16.msra.mxu0 %v389
    %612 = vmatpush.bf16.msra.mxu0 %v385
    %613 = vmatpush.bf16.msra.mxu0 %v381
    %614 = vmatpush.bf16.msra.mxu0 %v377
    %615 = vmatpush.bf16.msra.mxu0 %v373
    %616 = vmatpush.bf16.msra.mxu0 %v369
    %617 = vmatmul.bf16.gmra.mxu0 %v141
    %v618 = vpop.f32.mrf.mxu0
    %v619 = vadd.f32 %v205, %v618
    %v620 = vpop.f32.mrf.mxu0
    %v621 = vadd.f32 %v205, %v620
    %622 = vmatmul.bf16.gmra.mxu0 %v143
    %v623 = vpop.f32.mrf.mxu0
    %v624 = vadd.f32 %v205, %v623
    %v625 = vpop.f32.mrf.mxu0
    %v626 = vadd.f32 %v205, %v625
    %627 = vmatmul.bf16.gmra.mxu0 %v145
    %v628 = vpop.f32.mrf.mxu0
    %v629 = vadd.f32 %v205, %v628
    %v630 = vpop.f32.mrf.mxu0
    %v631 = vadd.f32 %v205, %v630
    %632 = vmatmul.bf16.gmra.mxu0 %v147
    %v633 = vpop.f32.mrf.mxu0
    %v634 = vadd.f32 %v205, %v633
    %v635 = vpop.f32.mrf.mxu0
    %v636 = vadd.f32 %v205, %v635
    %637 = vdwg.mxu0
    %638 = vmatpush.bf16.msra.mxu0 0
    %639 = vmatpush.bf16.msra.mxu0 0
    %640 = vmatpush.bf16.msra.mxu0 0
    %641 = vmatpush.bf16.msra.mxu0 %v488
    %642 = vmatpush.bf16.msra.mxu0 %v413
    %643 = vmatpush.bf16.msra.mxu0 %v409
    %644 = vmatpush.bf16.msra.mxu0 %v405
    %645 = vmatpush.bf16.msra.mxu0 %v401
    %646 = vmatmul.bf16.gmra.mxu0 %v469
    %v647 = vpop.f32.mrf.mxu0
    %v648 = vadd.f32 %v619, %v647
    %v649 = vpop.f32.mrf.mxu0
    %v650 = vadd.f32 %v621, %v649
    %651 = vmatmul.bf16.gmra.mxu0 %v472
    %v652 = vpop.f32.mrf.mxu0
    %v653 = vadd.f32 %v624, %v652
    %v654 = vpop.f32.mrf.mxu0
    %v655 = vadd.f32 %v626, %v654
    %656 = vmatmul.bf16.gmra.mxu0 %v475
    %v657 = vpop.f32.mrf.mxu0
    %v658 = vadd.f32 %v629, %v657
    %v659 = vpop.f32.mrf.mxu0
    %v660 = vadd.f32 %v631, %v659
    %661 = vmatmul.bf16.gmra.mxu0 %v478
    %v662 = vpop.f32.mrf.mxu0
    %v663 = vadd.f32 %v634, %v662
    %v664 = vpop.f32.mrf.mxu0
    %v665 = vadd.f32 %v636, %v664
    %666 = vdwg.mxu0
    %667 = vmatpush.bf16.msra.mxu0 %v398
    %668 = vmatpush.bf16.msra.mxu0 %v394
    %669 = vmatpush.bf16.msra.mxu0 %v390
    %670 = vmatpush.bf16.msra.mxu0 %v386
    %671 = vmatpush.bf16.msra.mxu0 %v382
    %672 = vmatpush.bf16.msra.mxu0 %v378
    %673 = vmatpush.bf16.msra.mxu0 %v374
    %674 = vmatpush.bf16.msra.mxu0 %v370
    %675 = vmatmul.bf16.gmra.mxu0 %v141
    %v676 = vpop.f32.mrf.mxu0
    %v677 = vadd.f32 %v206, %v676
    %v678 = vpop.f32.mrf.mxu0
    %v679 = vadd.f32 %v206, %v678
    %680 = vmatmul.bf16.gmra.mxu0 %v143
    %v681 = vpop.f32.mrf.mxu0
    %v682 = vadd.f32 %v206, %v681
    %v683 = vpop.f32.mrf.mxu0
    %v684 = vadd.f32 %v206, %v683
    %685 = vmatmul.bf16.gmra.mxu0 %v145
    %v686 = vpop.f32.mrf.mxu0
    %v687 = vadd.f32 %v206, %v686
    %v688 = vpop.f32.mrf.mxu0
    %v689 = vadd.f32 %v206, %v688
    %690 = vmatmul.bf16.gmra.mxu0 %v147
    %v691 = vpop.f32.mrf.mxu0
    %v692 = vadd.f32 %v206, %v691
    %v693 = vpop.f32.mrf.mxu0
    %v694 = vadd.f32 %v206, %v693
    %695 = vdwg.mxu0
    %696 = vmatpush.bf16.msra.mxu0 0
    %697 = vmatpush.bf16.msra.mxu0 0
    %698 = vmatpush.bf16.msra.mxu0 0
    %699 = vmatpush.bf16.msra.mxu0 %v491
    %700 = vmatpush.bf16.msra.mxu0 %v414
    %701 = vmatpush.bf16.msra.mxu0 %v410
    %702 = vmatpush.bf16.msra.mxu0 %v406
    %703 = vmatpush.bf16.msra.mxu0 %v402
    %704 = vmatmul.bf16.gmra.mxu0 %v469
    %v705 = vpop.f32.mrf.mxu0
    %v706 = vadd.f32 %v677, %v705
    %v707 = vpop.f32.mrf.mxu0
    %v708 = vadd.f32 %v679, %v707
    %709 = vmatmul.bf16.gmra.mxu0 %v472
    %v710 = vpop.f32.mrf.mxu0
    %v711 = vadd.f32 %v682, %v710
    %v712 = vpop.f32.mrf.mxu0
    %v713 = vadd.f32 %v684, %v712
    %714 = vmatmul.bf16.gmra.mxu0 %v475
    %v715 = vpop.f32.mrf.mxu0
    %v716 = vadd.f32 %v687, %v715
    %v717 = vpop.f32.mrf.mxu0
    %v718 = vadd.f32 %v689, %v717
    %719 = vmatmul.bf16.gmra.mxu0 %v478
    %v720 = vpop.f32.mrf.mxu0
    %v721 = vadd.f32 %v692, %v720
    %v722 = vpop.f32.mrf.mxu0
    %v723 = vadd.f32 %v694, %v722
    %724 = vdwg.mxu0
    %v725 = vmax.f32 %v532, 0.0
    %v726 = vmax.f32 %v590, 0.0
    %v727 = vmax.f32 %v648, 0.0
    %v728 = vmax.f32 %v706, 0.0
    %v729 = vmax.f32 %v534, 0.0
    %v730 = vmax.f32 %v592, 0.0
    %v731 = vmax.f32 %v650, 0.0
    %v732 = vmax.f32 %v708, 0.0
    %v733 = vmax.f32 %v537, 0.0
    %v734 = vmax.f32 %v595, 0.0
    %v735 = vmax.f32 %v653, 0.0
    %v736 = vmax.f32 %v711, 0.0
    %v737 = vmax.f32 %v539, 0.0
    %v738 = vmax.f32 %v597, 0.0
    %v739 = vmax.f32 %v655, 0.0
    %v740 = vmax.f32 %v713, 0.0
    %v741 = vmax.f32 %v542, 0.0
    %v742 = vmax.f32 %v600, 0.0
    %v743 = vmax.f32 %v658, 0.0
    %v744 = vmax.f32 %v716, 0.0
    %v745 = vmax.f32 %v544, 0.0
    %v746 = vmax.f32 %v602, 0.0
    %v747 = vmax.f32 %v660, 0.0
    %v748 = vmax.f32 %v718, 0.0
    %v749 = vmax.f32 %v547, 0.0
    %v750 = vmax.f32 %v605, 0.0
    %v751 = vmax.f32 %v663, 0.0
    %v752 = vmax.f32 %v721, 0.0
    %v753 = vmax.f32 %v549, 0.0
    %v754 = vmax.f32 %v607, 0.0
    %v755 = vmax.f32 %v665, 0.0
    %v756 = vmax.f32 %v723, 0.0
    %v757 = vpack.c.bf16 %v729, %v725
    %v758 = vpack.c.bf16 %v730, %v726
    %v759 = vpack.c.bf16 %v731, %v727
    %v760 = vpack.c.bf16 %v732, %v728
    %v761 = vpack.c.bf16 %v737, %v733
    %v762 = vpack.c.bf16 %v738, %v734
    %v763 = vpack.c.bf16 %v739, %v735
    %v764 = vpack.c.bf16 %v740, %v736
    %v765 = vpack.c.bf16 %v745, %v741
    %v766 = vpack.c.bf16 %v746, %v742
    %v767 = vpack.c.bf16 %v747, %v743
    %v768 = vpack.c.bf16 %v748, %v744
    %v769 = vpack.c.bf16 %v753, %v749
    %v770 = vpack.c.bf16 %v754, %v750
    %v771 = vpack.c.bf16 %v755, %v751
    %v772 = vpack.c.bf16 %v756, %v752
    %v773 = vld [vmem:[#allocation7] sm:$0xff]
    %v774 = vld [vmem:[#allocation7 + $0x8] sm:$0xff]
    %v775 = vld [vmem:[#allocation7 + $0x10] sm:$0xff]
    %v776 = vld [vmem:[#allocation7 + $0x18] sm:$0xff]
    %v777 = vld [vmem:[#allocation7 + $0x20] sm:$0xff]
    %v778 = vld [vmem:[#allocation7 + $0x28] sm:$0xff]
    %v779 = vld [vmem:[#allocation7 + $0x30] sm:$0xff]
    %v780 = vld [vmem:[#allocation7 + $0x38] sm:$0xff]
    %v781 = vld [vmem:[#allocation7 + $0x40] sm:$0xff]
    %v782 = vld [vmem:[#allocation7 + $0x48] sm:$0xff]
    %v783 = vld [vmem:[#allocation7 + $0x50] sm:$0xff]
    %v784 = vld [vmem:[#allocation7 + $0x58] sm:$0xff]
    %v785 = vld [vmem:[#allocation7 + $0x60] sm:$0xff]
    %v786 = vld [vmem:[#allocation7 + $0x68] sm:$0xff]
    %v787 = vld [vmem:[#allocation7 + $0x70] sm:$0xff]
    %v788 = vld [vmem:[#allocation7 + $0x78] sm:$0xff]
    %v789 = vld [vmem:[#allocation7 + $0x80] sm:$0xff]
    %v790 = vld [vmem:[#allocation7 + $0x88] sm:$0xff]
    %v791 = vld [vmem:[#allocation7 + $0x90] sm:$0xff]
    %v792 = vld [vmem:[#allocation7 + $0x98] sm:$0xff]
    %v793 = vld [vmem:[#allocation7 + $0xa0] sm:$0xff]
    %v794 = vld [vmem:[#allocation7 + $0xa8] sm:$0xff]
    %v795 = vld [vmem:[#allocation7 + $0xb0] sm:$0xff]
    %v796 = vld [vmem:[#allocation7 + $0xb8] sm:$0xff]
    %v797 = vld [vmem:[#allocation7 + $0xc0] sm:$0xff]
    %v798 = vld [vmem:[#allocation7 + $0xc8] sm:$0xff]
    %v799 = vld [vmem:[#allocation7 + $0xd0] sm:$0xff]
    %v800 = vld [vmem:[#allocation7 + $0xd8] sm:$0xff]
    %v801 = vld [vmem:[#allocation7 + $0xe0] sm:$0xff]
    %v802 = vld [vmem:[#allocation7 + $0xe8] sm:$0xff]
    %v803 = vld [vmem:[#allocation7 + $0xf0] sm:$0xff]
    %v804 = vld [vmem:[#allocation7 + $0xf8] sm:$0xff]
    %v805 = vld [vmem:[#allocation7 + $0x100] sm:$0xff]
    %v806 = vld [vmem:[#allocation7 + $0x108] sm:$0xff]
    %v807 = vld [vmem:[#allocation7 + $0x110] sm:$0xff]
    %v808 = vld [vmem:[#allocation7 + $0x118] sm:$0xff]
    %v809 = vld [vmem:[#allocation7 + $0x120] sm:$0xff]
    %v810 = vld [vmem:[#allocation7 + $0x128] sm:$0xff]
    %v811 = vld [vmem:[#allocation7 + $0x130] sm:$0xff]
    %v812 = vld [vmem:[#allocation7 + $0x138] sm:$0xff]
    %v813 = vld [vmem:[#allocation7 + $0x140] sm:$0xff]
    %v814 = vld [vmem:[#allocation7 + $0x148] sm:$0xff]
    %v815 = vld [vmem:[#allocation7 + $0x150] sm:$0xff]
    %v816 = vld [vmem:[#allocation7 + $0x158] sm:$0xff]
    %v817 = vld [vmem:[#allocation7 + $0x160] sm:$0xff]
    %v818 = vld [vmem:[#allocation7 + $0x168] sm:$0xff]
    %v819 = vld [vmem:[#allocation7 + $0x170] sm:$0xff]
    %v820 = vld [vmem:[#allocation7 + $0x178] sm:$0xff]
    %v821 = vld [vmem:[#allocation7 + $0x180] sm:$0xff]
    %v822 = vld [vmem:[#allocation7 + $0x188] sm:$0xff]
    %v823 = vld [vmem:[#allocation7 + $0x190] sm:$0xff]
    %v824 = vld [vmem:[#allocation7 + $0x198] sm:$0xff]
    %v825 = vld [vmem:[#allocation7 + $0x1a0] sm:$0xff]
    %v826 = vld [vmem:[#allocation7 + $0x1a8] sm:$0xff]
    %v827 = vld [vmem:[#allocation7 + $0x1b0] sm:$0xff]
    %v828 = vld [vmem:[#allocation7 + $0x1b8] sm:$0xff]
    %v829 = vld [vmem:[#allocation7 + $0x1c0] sm:$0xff]
    %v830 = vld [vmem:[#allocation7 + $0x1c8] sm:$0xff]
    %v831 = vld [vmem:[#allocation7 + $0x1d0] sm:$0xff]
    %v832 = vld [vmem:[#allocation7 + $0x1d8] sm:$0xff]
    %v833 = vld [vmem:[#allocation7 + $0x1e0] sm:$0xff]
    %v834 = vld [vmem:[#allocation7 + $0x1e8] sm:$0xff]
    %v835 = vld [vmem:[#allocation7 + $0x1f0] sm:$0xff]
    %v836 = vld [vmem:[#allocation7 + $0x1f8] sm:$0xff]
    %v837 = vld [vmem:[%s4] sm:$0x3]
    %v839 = vperm.slane %v837, 0
    %v840 = vperm.slane %v837, 1
    %v907 = vunpack.c.l.b16 %v773
    %v908 = vunpack.c.h.b16 %v773
    %v909 = vunpack.c.l.b16 %v774
    %v910 = vunpack.c.h.b16 %v774
    %v911 = vunpack.c.l.b16 %v775
    %v912 = vunpack.c.h.b16 %v775
    %v913 = vunpack.c.l.b16 %v776
    %v914 = vunpack.c.h.b16 %v776
    %v915 = vunpack.c.l.b16 %v777
    %v916 = vunpack.c.h.b16 %v777
    %v917 = vunpack.c.l.b16 %v778
    %v918 = vunpack.c.h.b16 %v778
    %v919 = vunpack.c.l.b16 %v779
    %v920 = vunpack.c.h.b16 %v779
    %v921 = vunpack.c.l.b16 %v780
    %v922 = vunpack.c.h.b16 %v780
    %v923 = vunpack.c.l.b16 %v781
    %v924 = vunpack.c.h.b16 %v781
    %v925 = vunpack.c.l.b16 %v782
    %v926 = vunpack.c.h.b16 %v782
    %v927 = vunpack.c.l.b16 %v783
    %v928 = vunpack.c.h.b16 %v783
    %v929 = vunpack.c.l.b16 %v784
    %v930 = vunpack.c.h.b16 %v784
    %v931 = vunpack.c.l.b16 %v785
    %v932 = vunpack.c.h.b16 %v785
    %v933 = vunpack.c.l.b16 %v786
    %v934 = vunpack.c.h.b16 %v786
    %v935 = vunpack.c.l.b16 %v787
    %v936 = vunpack.c.h.b16 %v787
    %v937 = vunpack.c.l.b16 %v788
    %v938 = vunpack.c.h.b16 %v788
    %v939 = vunpack.c.l.b16 %v789
    %v940 = vunpack.c.h.b16 %v789
    %v941 = vunpack.c.l.b16 %v790
    %v942 = vunpack.c.h.b16 %v790
    %v943 = vunpack.c.l.b16 %v791
    %v944 = vunpack.c.h.b16 %v791
    %v945 = vunpack.c.l.b16 %v792
    %v946 = vunpack.c.h.b16 %v792
    %v947 = vunpack.c.l.b16 %v793
    %v948 = vunpack.c.h.b16 %v793
    %v949 = vunpack.c.l.b16 %v794
    %v950 = vunpack.c.h.b16 %v794
    %v951 = vunpack.c.l.b16 %v795
    %v952 = vunpack.c.h.b16 %v795
    %v953 = vunpack.c.l.b16 %v796
    %v954 = vunpack.c.h.b16 %v796
    %v955 = vunpack.c.l.b16 %v797
    %v956 = vunpack.c.h.b16 %v797
    %v957 = vunpack.c.l.b16 %v798
    %v958 = vunpack.c.h.b16 %v798
    %v959 = vunpack.c.l.b16 %v799
    %v960 = vunpack.c.h.b16 %v799
    %v961 = vunpack.c.l.b16 %v800
    %v962 = vunpack.c.h.b16 %v800
    %v963 = vunpack.c.l.b16 %v801
    %v964 = vunpack.c.h.b16 %v801
    %v965 = vunpack.c.l.b16 %v802
    %v966 = vunpack.c.h.b16 %v802
    %v967 = vunpack.c.l.b16 %v803
    %v968 = vunpack.c.h.b16 %v803
    %v969 = vunpack.c.l.b16 %v804
    %v970 = vunpack.c.h.b16 %v804
    %v971 = vunpack.c.l.b16 %v805
    %v972 = vunpack.c.h.b16 %v805
    %v973 = vunpack.c.l.b16 %v806
    %v974 = vunpack.c.h.b16 %v806
    %v975 = vunpack.c.l.b16 %v807
    %v976 = vunpack.c.h.b16 %v807
    %v977 = vunpack.c.l.b16 %v808
    %v978 = vunpack.c.h.b16 %v808
    %v979 = vunpack.c.l.b16 %v809
    %v980 = vunpack.c.h.b16 %v809
    %v981 = vunpack.c.l.b16 %v810
    %v982 = vunpack.c.h.b16 %v810
    %v983 = vunpack.c.l.b16 %v811
    %v984 = vunpack.c.h.b16 %v811
    %v985 = vunpack.c.l.b16 %v812
    %v986 = vunpack.c.h.b16 %v812
    %v987 = vunpack.c.l.b16 %v813
    %v988 = vunpack.c.h.b16 %v813
    %v989 = vunpack.c.l.b16 %v814
    %v990 = vunpack.c.h.b16 %v814
    %v991 = vunpack.c.l.b16 %v815
    %v992 = vunpack.c.h.b16 %v815
    %v993 = vunpack.c.l.b16 %v816
    %v994 = vunpack.c.h.b16 %v816
    %v995 = vunpack.c.l.b16 %v817
    %v996 = vunpack.c.h.b16 %v817
    %v997 = vunpack.c.l.b16 %v818
    %v998 = vunpack.c.h.b16 %v818
    %v999 = vunpack.c.l.b16 %v819
    %v1000 = vunpack.c.h.b16 %v819
    %v1001 = vunpack.c.l.b16 %v820
    %v1002 = vunpack.c.h.b16 %v820
    %v1003 = vunpack.c.l.b16 %v821
    %v1004 = vunpack.c.h.b16 %v821
    %v1005 = vunpack.c.l.b16 %v822
    %v1006 = vunpack.c.h.b16 %v822
    %v1007 = vunpack.c.l.b16 %v823
    %v1008 = vunpack.c.h.b16 %v823
    %v1009 = vunpack.c.l.b16 %v824
    %v1010 = vunpack.c.h.b16 %v824
    %v1011 = vunpack.c.l.b16 %v825
    %v1012 = vunpack.c.h.b16 %v825
    %v1013 = vunpack.c.l.b16 %v826
    %v1014 = vunpack.c.h.b16 %v826
    %v1015 = vunpack.c.l.b16 %v827
    %v1016 = vunpack.c.h.b16 %v827
    %v1017 = vunpack.c.l.b16 %v828
    %v1018 = vunpack.c.h.b16 %v828
    %v1019 = vunpack.c.l.b16 %v829
    %v1020 = vunpack.c.h.b16 %v829
    %v1021 = vunpack.c.l.b16 %v830
    %v1022 = vunpack.c.h.b16 %v830
    %v1023 = vunpack.c.l.b16 %v831
    %v1024 = vunpack.c.h.b16 %v831
    %v1025 = vunpack.c.l.b16 %v832
    %v1026 = vunpack.c.h.b16 %v832
    %v1027 = vunpack.c.l.b16 %v833
    %v1028 = vunpack.c.h.b16 %v833
    %v1029 = vunpack.c.l.b16 %v834
    %v1030 = vunpack.c.h.b16 %v834
    %v1031 = vunpack.c.l.b16 %v835
    %v1032 = vunpack.c.h.b16 %v835
    %v1033 = vunpack.c.l.b16 %v836
    %v1034 = vunpack.c.h.b16 %v836
    %v1035 = vpack.c.b16 %v909, %v907
    %v1036 = vpack.c.b16 %v910, %v908
    %v1037 = vpack.c.b16 %v913, %v911
    %v1038 = vpack.c.b16 %v914, %v912
    %v1039 = vpack.c.b16 %v917, %v915
    %v1040 = vpack.c.b16 %v918, %v916
    %v1041 = vpack.c.b16 %v921, %v919
    %v1042 = vpack.c.b16 %v922, %v920
    %v1043 = vpack.c.b16 %v925, %v923
    %v1044 = vpack.c.b16 %v926, %v924
    %v1045 = vpack.c.b16 %v929, %v927
    %v1046 = vpack.c.b16 %v930, %v928
    %v1047 = vpack.c.b16 %v933, %v931
    %v1048 = vpack.c.b16 %v934, %v932
    %v1049 = vpack.c.b16 %v937, %v935
    %v1050 = vpack.c.b16 %v938, %v936
    %v1051 = vpack.c.b16 %v941, %v939
    %v1052 = vpack.c.b16 %v942, %v940
    %v1053 = vpack.c.b16 %v945, %v943
    %v1054 = vpack.c.b16 %v946, %v944
    %v1055 = vpack.c.b16 %v949, %v947
    %v1056 = vpack.c.b16 %v950, %v948
    %v1057 = vpack.c.b16 %v953, %v951
    %v1058 = vpack.c.b16 %v954, %v952
    %v1059 = vpack.c.b16 %v957, %v955
    %v1060 = vpack.c.b16 %v958, %v956
    %v1061 = vpack.c.b16 %v961, %v959
    %v1062 = vpack.c.b16 %v962, %v960
    %v1063 = vpack.c.b16 %v965, %v963
    %v1064 = vpack.c.b16 %v966, %v964
    %v1065 = vpack.c.b16 %v969, %v967
    %v1066 = vpack.c.b16 %v970, %v968
    %v1067 = vpack.c.b16 %v973, %v971
    %v1068 = vpack.c.b16 %v974, %v972
    %v1069 = vpack.c.b16 %v977, %v975
    %v1070 = vpack.c.b16 %v978, %v976
    %v1071 = vpack.c.b16 %v981, %v979
    %v1072 = vpack.c.b16 %v982, %v980
    %v1073 = vpack.c.b16 %v985, %v983
    %v1074 = vpack.c.b16 %v986, %v984
    %v1075 = vpack.c.b16 %v989, %v987
    %v1076 = vpack.c.b16 %v990, %v988
    %v1077 = vpack.c.b16 %v993, %v991
    %v1078 = vpack.c.b16 %v994, %v992
    %v1079 = vpack.c.b16 %v997, %v995
    %v1080 = vpack.c.b16 %v998, %v996
    %v1081 = vpack.c.b16 %v1001, %v999
    %v1082 = vpack.c.b16 %v1002, %v1000
    %v1083 = vpack.c.b16 %v1005, %v1003
    %v1084 = vpack.c.b16 %v1006, %v1004
    %v1085 = vpack.c.b16 %v1009, %v1007
    %v1086 = vpack.c.b16 %v1010, %v1008
    %v1087 = vpack.c.b16 %v1013, %v1011
    %v1088 = vpack.c.b16 %v1014, %v1012
    %v1089 = vpack.c.b16 %v1017, %v1015
    %v1090 = vpack.c.b16 %v1018, %v1016
    %v1091 = vpack.c.b16 %v1021, %v1019
    %v1092 = vpack.c.b16 %v1022, %v1020
    %v1093 = vpack.c.b16 %v1025, %v1023
    %v1094 = vpack.c.b16 %v1026, %v1024
    %v1095 = vpack.c.b16 %v1029, %v1027
    %v1096 = vpack.c.b16 %v1030, %v1028
    %v1097 = vpack.c.b16 %v1033, %v1031
    %v1098 = vpack.c.b16 %v1034, %v1032
    %1163 = vmatpush.bf16.msra.mxu0 %v1049
    %1164 = vmatpush.bf16.msra.mxu0 %v1047
    %1165 = vmatpush.bf16.msra.mxu0 %v1045
    %1166 = vmatpush.bf16.msra.mxu0 %v1043
    %1167 = vmatpush.bf16.msra.mxu0 %v1041
    %1168 = vmatpush.bf16.msra.mxu0 %v1039
    %1169 = vmatpush.bf16.msra.mxu0 %v1037
    %1170 = vmatpush.bf16.msra.mxu0 %v1035
    %1171 = vmatmul.bf16.gmra.mxu0 %v757
    %v1172 = vpop.f32.mrf.mxu0
    %v1173 = vadd.f32 %v839, %v1172
    %v1174 = vpop.f32.mrf.mxu0
    %v1175 = vadd.f32 %v839, %v1174
    %1176 = vmatmul.bf16.gmra.mxu0 %v761
    %v1177 = vpop.f32.mrf.mxu0
    %v1178 = vadd.f32 %v839, %v1177
    %v1179 = vpop.f32.mrf.mxu0
    %v1180 = vadd.f32 %v839, %v1179
    %1181 = vmatmul.bf16.gmra.mxu0 %v765
    %v1182 = vpop.f32.mrf.mxu0
    %v1183 = vadd.f32 %v839, %v1182
    %v1184 = vpop.f32.mrf.mxu0
    %v1185 = vadd.f32 %v839, %v1184
    %1186 = vmatmul.bf16.gmra.mxu0 %v769
    %v1187 = vpop.f32.mrf.mxu0
    %v1188 = vadd.f32 %v839, %v1187
    %v1189 = vpop.f32.mrf.mxu0
    %v1190 = vadd.f32 %v839, %v1189
    %1191 = vdwg.mxu0
    %1192 = vmatpush.bf16.msra.mxu0 %v1065
    %1193 = vmatpush.bf16.msra.mxu0 %v1063
    %1194 = vmatpush.bf16.msra.mxu0 %v1061
    %1195 = vmatpush.bf16.msra.mxu0 %v1059
    %1196 = vmatpush.bf16.msra.mxu0 %v1057
    %1197 = vmatpush.bf16.msra.mxu0 %v1055
    %1198 = vmatpush.bf16.msra.mxu0 %v1053
    %1199 = vmatpush.bf16.msra.mxu0 %v1051
    %1200 = vmatmul.bf16.gmra.mxu0 %v758
    %v1201 = vpop.f32.mrf.mxu0
    %v1202 = vadd.f32 %v1173, %v1201
    %v1203 = vpop.f32.mrf.mxu0
    %v1204 = vadd.f32 %v1175, %v1203
    %1205 = vmatmul.bf16.gmra.mxu0 %v762
    %v1206 = vpop.f32.mrf.mxu0
    %v1207 = vadd.f32 %v1178, %v1206
    %v1208 = vpop.f32.mrf.mxu0
    %v1209 = vadd.f32 %v1180, %v1208
    %1210 = vmatmul.bf16.gmra.mxu0 %v766
    %v1211 = vpop.f32.mrf.mxu0
    %v1212 = vadd.f32 %v1183, %v1211
    %v1213 = vpop.f32.mrf.mxu0
    %v1214 = vadd.f32 %v1185, %v1213
    %1215 = vmatmul.bf16.gmra.mxu0 %v770
    %v1216 = vpop.f32.mrf.mxu0
    %v1217 = vadd.f32 %v1188, %v1216
    %v1218 = vpop.f32.mrf.mxu0
    %v1219 = vadd.f32 %v1190, %v1218
    %1220 = vdwg.mxu0
    %1221 = vmatpush.bf16.msra.mxu0 %v1081
    %1222 = vmatpush.bf16.msra.mxu0 %v1079
    %1223 = vmatpush.bf16.msra.mxu0 %v1077
    %1224 = vmatpush.bf16.msra.mxu0 %v1075
    %1225 = vmatpush.bf16.msra.mxu0 %v1073
    %1226 = vmatpush.bf16.msra.mxu0 %v1071
    %1227 = vmatpush.bf16.msra.mxu0 %v1069
    %1228 = vmatpush.bf16.msra.mxu0 %v1067
    %1229 = vmatmul.bf16.gmra.mxu0 %v759
    %v1230 = vpop.f32.mrf.mxu0
    %v1231 = vadd.f32 %v1202, %v1230
    %v1232 = vpop.f32.mrf.mxu0
    %v1233 = vadd.f32 %v1204, %v1232
    %1234 = vmatmul.bf16.gmra.mxu0 %v763
    %v1235 = vpop.f32.mrf.mxu0
    %v1236 = vadd.f32 %v1207, %v1235
    %v1237 = vpop.f32.mrf.mxu0
    %v1238 = vadd.f32 %v1209, %v1237
    %1239 = vmatmul.bf16.gmra.mxu0 %v767
    %v1240 = vpop.f32.mrf.mxu0
    %v1241 = vadd.f32 %v1212, %v1240
    %v1242 = vpop.f32.mrf.mxu0
    %v1243 = vadd.f32 %v1214, %v1242
    %1244 = vmatmul.bf16.gmra.mxu0 %v771
    %v1245 = vpop.f32.mrf.mxu0
    %v1246 = vadd.f32 %v1217, %v1245
    %v1247 = vpop.f32.mrf.mxu0
    %v1248 = vadd.f32 %v1219, %v1247
    %1249 = vdwg.mxu0
    %1250 = vmatpush.bf16.msra.mxu0 %v1097
    %1251 = vmatpush.bf16.msra.mxu0 %v1095
    %1252 = vmatpush.bf16.msra.mxu0 %v1093
    %1253 = vmatpush.bf16.msra.mxu0 %v1091
    %1254 = vmatpush.bf16.msra.mxu0 %v1089
    %1255 = vmatpush.bf16.msra.mxu0 %v1087
    %1256 = vmatpush.bf16.msra.mxu0 %v1085
    %1257 = vmatpush.bf16.msra.mxu0 %v1083
    %1258 = vmatmul.bf16.gmra.mxu0 %v760
    %v1259 = vpop.f32.mrf.mxu0
    %v1260 = vadd.f32 %v1231, %v1259
    %v1261 = vpop.f32.mrf.mxu0
    %v1262 = vadd.f32 %v1233, %v1261
    %1263 = vmatmul.bf16.gmra.mxu0 %v764
    %v1264 = vpop.f32.mrf.mxu0
    %v1265 = vadd.f32 %v1236, %v1264
    %v1266 = vpop.f32.mrf.mxu0
    %v1267 = vadd.f32 %v1238, %v1266
    %1268 = vmatmul.bf16.gmra.mxu0 %v768
    %v1269 = vpop.f32.mrf.mxu0
    %v1270 = vadd.f32 %v1241, %v1269
    %v1271 = vpop.f32.mrf.mxu0
    %v1272 = vadd.f32 %v1243, %v1271
    %1273 = vmatmul.bf16.gmra.mxu0 %v772
    %v1274 = vpop.f32.mrf.mxu0
    %v1275 = vadd.f32 %v1246, %v1274
    %v1276 = vpop.f32.mrf.mxu0
    %v1277 = vadd.f32 %v1248, %v1276
    %1278 = vdwg.mxu0
    %1279 = vmatpush.bf16.msra.mxu0 %v1050
    %1280 = vmatpush.bf16.msra.mxu0 %v1048
    %1281 = vmatpush.bf16.msra.mxu0 %v1046
    %1282 = vmatpush.bf16.msra.mxu0 %v1044
    %1283 = vmatpush.bf16.msra.mxu0 %v1042
    %1284 = vmatpush.bf16.msra.mxu0 %v1040
    %1285 = vmatpush.bf16.msra.mxu0 %v1038
    %1286 = vmatpush.bf16.msra.mxu0 %v1036
    %1287 = vmatmul.bf16.gmra.mxu0 %v757
    %v1288 = vpop.f32.mrf.mxu0
    %v1289 = vadd.f32 %v840, %v1288
    %v1290 = vpop.f32.mrf.mxu0
    %v1291 = vadd.f32 %v840, %v1290
    %1292 = vmatmul.bf16.gmra.mxu0 %v761
    %v1293 = vpop.f32.mrf.mxu0
    %v1294 = vadd.f32 %v840, %v1293
    %v1295 = vpop.f32.mrf.mxu0
    %v1296 = vadd.f32 %v840, %v1295
    %1297 = vmatmul.bf16.gmra.mxu0 %v765
    %v1298 = vpop.f32.mrf.mxu0
    %v1299 = vadd.f32 %v840, %v1298
    %v1300 = vpop.f32.mrf.mxu0
    %v1301 = vadd.f32 %v840, %v1300
    %1302 = vmatmul.bf16.gmra.mxu0 %v769
    %v1303 = vpop.f32.mrf.mxu0
    %v1304 = vadd.f32 %v840, %v1303
    %v1305 = vpop.f32.mrf.mxu0
    %v1306 = vadd.f32 %v840, %v1305
    %1307 = vdwg.mxu0
    %1308 = vmatpush.bf16.msra.mxu0 %v1066
    %1309 = vmatpush.bf16.msra.mxu0 %v1064
    %1310 = vmatpush.bf16.msra.mxu0 %v1062
    %1311 = vmatpush.bf16.msra.mxu0 %v1060
    %1312 = vmatpush.bf16.msra.mxu0 %v1058
    %1313 = vmatpush.bf16.msra.mxu0 %v1056
    %1314 = vmatpush.bf16.msra.mxu0 %v1054
    %1315 = vmatpush.bf16.msra.mxu0 %v1052
    %1316 = vmatmul.bf16.gmra.mxu0 %v758
    %v1317 = vpop.f32.mrf.mxu0
    %v1318 = vadd.f32 %v1289, %v1317
    %v1319 = vpop.f32.mrf.mxu0
    %v1320 = vadd.f32 %v1291, %v1319
    %1321 = vmatmul.bf16.gmra.mxu0 %v762
    %v1322 = vpop.f32.mrf.mxu0
    %v1323 = vadd.f32 %v1294, %v1322
    %v1324 = vpop.f32.mrf.mxu0
    %v1325 = vadd.f32 %v1296, %v1324
    %1326 = vmatmul.bf16.gmra.mxu0 %v766
    %v1327 = vpop.f32.mrf.mxu0
    %v1328 = vadd.f32 %v1299, %v1327
    %v1329 = vpop.f32.mrf.mxu0
    %v1330 = vadd.f32 %v1301, %v1329
    %1331 = vmatmul.bf16.gmra.mxu0 %v770
    %v1332 = vpop.f32.mrf.mxu0
    %v1333 = vadd.f32 %v1304, %v1332
    %v1334 = vpop.f32.mrf.mxu0
    %v1335 = vadd.f32 %v1306, %v1334
    %1336 = vdwg.mxu0
    %1337 = vmatpush.bf16.msra.mxu0 %v1082
    %1338 = vmatpush.bf16.msra.mxu0 %v1080
    %1339 = vmatpush.bf16.msra.mxu0 %v1078
    %1340 = vmatpush.bf16.msra.mxu0 %v1076
    %1341 = vmatpush.bf16.msra.mxu0 %v1074
    %1342 = vmatpush.bf16.msra.mxu0 %v1072
    %1343 = vmatpush.bf16.msra.mxu0 %v1070
    %1344 = vmatpush.bf16.msra.mxu0 %v1068
    %1345 = vmatmul.bf16.gmra.mxu0 %v759
    %v1346 = vpop.f32.mrf.mxu0
    %v1347 = vadd.f32 %v1318, %v1346
    %v1348 = vpop.f32.mrf.mxu0
    %v1349 = vadd.f32 %v1320, %v1348
    %1350 = vmatmul.bf16.gmra.mxu0 %v763
    %v1351 = vpop.f32.mrf.mxu0
    %v1352 = vadd.f32 %v1323, %v1351
    %v1353 = vpop.f32.mrf.mxu0
    %v1354 = vadd.f32 %v1325, %v1353
    %1355 = vmatmul.bf16.gmra.mxu0 %v767
    %v1356 = vpop.f32.mrf.mxu0
    %v1357 = vadd.f32 %v1328, %v1356
    %v1358 = vpop.f32.mrf.mxu0
    %v1359 = vadd.f32 %v1330, %v1358
    %1360 = vmatmul.bf16.gmra.mxu0 %v771
    %v1361 = vpop.f32.mrf.mxu0
    %v1362 = vadd.f32 %v1333, %v1361
    %v1363 = vpop.f32.mrf.mxu0
    %v1364 = vadd.f32 %v1335, %v1363
    %1365 = vdwg.mxu0
    %1366 = vmatpush.bf16.msra.mxu0 %v1098
    %1367 = vmatpush.bf16.msra.mxu0 %v1096
    %1368 = vmatpush.bf16.msra.mxu0 %v1094
    %1369 = vmatpush.bf16.msra.mxu0 %v1092
    %1370 = vmatpush.bf16.msra.mxu0 %v1090
    %1371 = vmatpush.bf16.msra.mxu0 %v1088
    %1372 = vmatpush.bf16.msra.mxu0 %v1086
    %1373 = vmatpush.bf16.msra.mxu0 %v1084
    %1374 = vmatmul.bf16.gmra.mxu0 %v760
    %v1375 = vpop.f32.mrf.mxu0
    %v1376 = vadd.f32 %v1347, %v1375
    %v1377 = vpop.f32.mrf.mxu0
    %v1378 = vadd.f32 %v1349, %v1377
    %1379 = vmatmul.bf16.gmra.mxu0 %v764
    %v1380 = vpop.f32.mrf.mxu0
    %v1381 = vadd.f32 %v1352, %v1380
    %v1382 = vpop.f32.mrf.mxu0
    %v1383 = vadd.f32 %v1354, %v1382
    %1384 = vmatmul.bf16.gmra.mxu0 %v768
    %v1385 = vpop.f32.mrf.mxu0
    %v1386 = vadd.f32 %v1357, %v1385
    %v1387 = vpop.f32.mrf.mxu0
    %v1388 = vadd.f32 %v1359, %v1387
    %1389 = vmatmul.bf16.gmra.mxu0 %v772
    %v1390 = vpop.f32.mrf.mxu0
    %v1391 = vadd.f32 %v1362, %v1390
    %v1392 = vpop.f32.mrf.mxu0
    %v1393 = vadd.f32 %v1364, %v1392
    %1394 = vdwg.mxu0
    %v1395 = vmax.f32 %v1260, 0.0
    %v1396 = vmax.f32 %v1376, 0.0
    %v1397 = vmax.f32 %v1262, 0.0
    %v1398 = vmax.f32 %v1378, 0.0
    %v1399 = vmax.f32 %v1265, 0.0
    %v1400 = vmax.f32 %v1381, 0.0
    %v1401 = vmax.f32 %v1267, 0.0
    %v1402 = vmax.f32 %v1383, 0.0
    %v1403 = vmax.f32 %v1270, 0.0
    %v1404 = vmax.f32 %v1386, 0.0
    %v1405 = vmax.f32 %v1272, 0.0
    %v1406 = vmax.f32 %v1388, 0.0
    %v1407 = vmax.f32 %v1275, 0.0
    %v1408 = vmax.f32 %v1391, 0.0
    %v1409 = vmax.f32 %v1277, 0.0
    %v1410 = vmax.f32 %v1393, 0.0
    %v1411 = vpack.c.bf16 %v1397, %v1395
    %v1412 = vpack.c.bf16 %v1398, %v1396
    %v1413 = vpack.c.bf16 %v1401, %v1399
    %v1414 = vpack.c.bf16 %v1402, %v1400
    %v1415 = vpack.c.bf16 %v1405, %v1403
    %v1416 = vpack.c.bf16 %v1406, %v1404
    %v1417 = vpack.c.bf16 %v1409, %v1407
    %v1418 = vpack.c.bf16 %v1410, %v1408
    %v1419 = vld [vmem:[#allocation9] sm:$0xf]
    %v1420 = vld [vmem:[#allocation9 + $0x4] sm:$0xf]
    %v1421 = vld [vmem:[#allocation9 + $0x8] sm:$0xf]
    %v1422 = vld [vmem:[#allocation9 + $0xc] sm:$0xf]
    %v1423 = vld [vmem:[#allocation9 + $0x10] sm:$0xf]
    %v1424 = vld [vmem:[#allocation9 + $0x14] sm:$0xf]
    %v1425 = vld [vmem:[#allocation9 + $0x18] sm:$0xf]
    %v1426 = vld [vmem:[#allocation9 + $0x1c] sm:$0xf]
    %v1427 = vld [vmem:[#allocation9 + $0x20] sm:$0xf]
    %v1428 = vld [vmem:[#allocation9 + $0x24] sm:$0xf]
    %v1429 = vld [vmem:[#allocation9 + $0x28] sm:$0xf]
    %v1430 = vld [vmem:[#allocation9 + $0x2c] sm:$0xf]
    %v1431 = vld [vmem:[#allocation9 + $0x30] sm:$0xf]
    %v1432 = vld [vmem:[#allocation9 + $0x34] sm:$0xf]
    %v1433 = vld [vmem:[#allocation9 + $0x38] sm:$0xf]
    %v1434 = vld [vmem:[#allocation9 + $0x3c] sm:$0xf]
    %v1435 = vld [vmem:[#allocation9 + $0x40] sm:$0xf]
    %v1436 = vld [vmem:[#allocation9 + $0x44] sm:$0xf]
    %v1437 = vld [vmem:[#allocation9 + $0x48] sm:$0xf]
    %v1438 = vld [vmem:[#allocation9 + $0x4c] sm:$0xf]
    %v1439 = vld [vmem:[#allocation9 + $0x50] sm:$0xf]
    %v1440 = vld [vmem:[#allocation9 + $0x54] sm:$0xf]
    %v1441 = vld [vmem:[#allocation9 + $0x58] sm:$0xf]
    %v1442 = vld [vmem:[#allocation9 + $0x5c] sm:$0xf]
    %v1443 = vld [vmem:[#allocation9 + $0x60] sm:$0xf]
    %v1444 = vld [vmem:[#allocation9 + $0x64] sm:$0xf]
    %v1445 = vld [vmem:[#allocation9 + $0x68] sm:$0xf]
    %v1446 = vld [vmem:[#allocation9 + $0x6c] sm:$0xf]
    %v1447 = vld [vmem:[#allocation9 + $0x70] sm:$0xf]
    %v1448 = vld [vmem:[#allocation9 + $0x74] sm:$0xf]
    %v1449 = vld [vmem:[#allocation9 + $0x78] sm:$0xf]
    %v1450 = vld [vmem:[#allocation9 + $0x7c] sm:$0xf]
    %v1451 = vld [vmem:[%s6] sm:$0x1]
    %v1453 = vperm.slane %v1451, 0
    %v1487 = vunpack.c.l.b16 %v1419
    %v1488 = vunpack.c.l.b16 %v1420
    %v1489 = vunpack.c.l.b16 %v1421
    %v1490 = vunpack.c.l.b16 %v1422
    %v1491 = vunpack.c.l.b16 %v1423
    %v1492 = vunpack.c.l.b16 %v1424
    %v1493 = vunpack.c.l.b16 %v1425
    %v1494 = vunpack.c.l.b16 %v1426
    %v1495 = vunpack.c.l.b16 %v1427
    %v1496 = vunpack.c.l.b16 %v1428
    %v1497 = vunpack.c.l.b16 %v1429
    %v1498 = vunpack.c.l.b16 %v1430
    %v1499 = vunpack.c.l.b16 %v1431
    %v1500 = vunpack.c.l.b16 %v1432
    %v1501 = vunpack.c.l.b16 %v1433
    %v1502 = vunpack.c.l.b16 %v1434
    %v1503 = vunpack.c.l.b16 %v1435
    %v1504 = vunpack.c.l.b16 %v1436
    %v1505 = vunpack.c.l.b16 %v1437
    %v1506 = vunpack.c.l.b16 %v1438
    %v1507 = vunpack.c.l.b16 %v1439
    %v1508 = vunpack.c.l.b16 %v1440
    %v1509 = vunpack.c.l.b16 %v1441
    %v1510 = vunpack.c.l.b16 %v1442
    %v1511 = vunpack.c.l.b16 %v1443
    %v1512 = vunpack.c.l.b16 %v1444
    %v1513 = vunpack.c.l.b16 %v1445
    %v1514 = vunpack.c.l.b16 %v1446
    %v1515 = vunpack.c.l.b16 %v1447
    %v1516 = vunpack.c.l.b16 %v1448
    %v1517 = vunpack.c.l.b16 %v1449
    %v1518 = vunpack.c.l.b16 %v1450
    %v1519 = vpack.c.b16 %v1488, %v1487
    %v1520 = vpack.c.b16 %v1490, %v1489
    %v1521 = vpack.c.b16 %v1492, %v1491
    %v1522 = vpack.c.b16 %v1494, %v1493
    %v1523 = vpack.c.b16 %v1496, %v1495
    %v1524 = vpack.c.b16 %v1498, %v1497
    %v1525 = vpack.c.b16 %v1500, %v1499
    %v1526 = vpack.c.b16 %v1502, %v1501
    %v1527 = vpack.c.b16 %v1504, %v1503
    %v1528 = vpack.c.b16 %v1506, %v1505
    %v1529 = vpack.c.b16 %v1508, %v1507
    %v1530 = vpack.c.b16 %v1510, %v1509
    %v1531 = vpack.c.b16 %v1512, %v1511
    %v1532 = vpack.c.b16 %v1514, %v1513
    %v1533 = vpack.c.b16 %v1516, %v1515
    %v1534 = vpack.c.b16 %v1518, %v1517
    %1551 = vmatpush.bf16.msra.mxu0 %v1526
    %1552 = vmatpush.bf16.msra.mxu0 %v1525
    %1553 = vmatpush.bf16.msra.mxu0 %v1524
    %1554 = vmatpush.bf16.msra.mxu0 %v1523
    %1555 = vmatpush.bf16.msra.mxu0 %v1522
    %1556 = vmatpush.bf16.msra.mxu0 %v1521
    %1557 = vmatpush.bf16.msra.mxu0 %v1520
    %1558 = vmatpush.bf16.msra.mxu0 %v1519
    %1559 = vmatmul.bf16.gmra.mxu0 %v1411
    %v1560 = vpop.f32.mrf.mxu0
    %v1561 = vadd.f32 %v1453, %v1560
    %v1562 = vpop.f32.mrf.mxu0
    %v1563 = vadd.f32 %v1453, %v1562
    %1564 = vmatmul.bf16.gmra.mxu0 %v1413
    %v1565 = vpop.f32.mrf.mxu0
    %v1566 = vadd.f32 %v1453, %v1565
    %v1567 = vpop.f32.mrf.mxu0
    %v1568 = vadd.f32 %v1453, %v1567
    %1569 = vmatmul.bf16.gmra.mxu0 %v1415
    %v1570 = vpop.f32.mrf.mxu0
    %v1571 = vadd.f32 %v1453, %v1570
    %v1572 = vpop.f32.mrf.mxu0
    %v1573 = vadd.f32 %v1453, %v1572
    %1574 = vmatmul.bf16.gmra.mxu0 %v1417
    %v1575 = vpop.f32.mrf.mxu0
    %v1576 = vadd.f32 %v1453, %v1575
    %v1577 = vpop.f32.mrf.mxu0
    %v1578 = vadd.f32 %v1453, %v1577
    %1579 = vdwg.mxu0
    %1580 = vmatpush.bf16.msra.mxu0 %v1534
    %1581 = vmatpush.bf16.msra.mxu0 %v1533
    %1582 = vmatpush.bf16.msra.mxu0 %v1532
    %1583 = vmatpush.bf16.msra.mxu0 %v1531
    %1584 = vmatpush.bf16.msra.mxu0 %v1530
    %1585 = vmatpush.bf16.msra.mxu0 %v1529
    %1586 = vmatpush.bf16.msra.mxu0 %v1528
    %1587 = vmatpush.bf16.msra.mxu0 %v1527
    %1588 = vmatmul.bf16.gmra.mxu0 %v1412
    %v1589 = vpop.f32.mrf.mxu0
    %v1590 = vadd.f32 %v1561, %v1589
    %v1591 = vpop.f32.mrf.mxu0
    %v1592 = vadd.f32 %v1563, %v1591
    %1593 = vmatmul.bf16.gmra.mxu0 %v1414
    %v1594 = vpop.f32.mrf.mxu0
    %v1595 = vadd.f32 %v1566, %v1594
    %v1596 = vpop.f32.mrf.mxu0
    %v1597 = vadd.f32 %v1568, %v1596
    %1598 = vmatmul.bf16.gmra.mxu0 %v1416
    %v1599 = vpop.f32.mrf.mxu0
    %v1600 = vadd.f32 %v1571, %v1599
    %v1601 = vpop.f32.mrf.mxu0
    %v1602 = vadd.f32 %v1573, %v1601
    %1603 = vmatmul.bf16.gmra.mxu0 %v1418
    %v1604 = vpop.f32.mrf.mxu0
    %v1605 = vadd.f32 %v1576, %v1604
    %v1606 = vpop.f32.mrf.mxu0
    %v1607 = vadd.f32 %v1578, %v1606
    %1608 = vdwg.mxu0
    %v1609 = vmax.f32 %v1590, 0.0
    %v1610 = vmax.f32 %v1592, 0.0
    %v1611 = vmax.f32 %v1595, 0.0
    %v1612 = vmax.f32 %v1597, 0.0
    %v1613 = vmax.f32 %v1600, 0.0
    %v1614 = vmax.f32 %v1602, 0.0
    %v1615 = vmax.f32 %v1605, 0.0
    %v1616 = vmax.f32 %v1607, 0.0
    %v1617 = vpack.c.bf16 %v1610, %v1609
    %v1618 = vpack.c.bf16 %v1612, %v1611
    %v1619 = vpack.c.bf16 %v1614, %v1613
    %v1620 = vpack.c.bf16 %v1616, %v1615
    %v1621 = vld [vmem:[#allocation10] sm:$0xf]
    %v1622 = vld [vmem:[#allocation10 + $0x4] sm:$0xf]
    %v1623 = vld [vmem:[#allocation10 + $0x8] sm:$0xf]
    %v1624 = vld [vmem:[#allocation10 + $0xc] sm:$0xf]
    %v1625 = vld [vmem:[#allocation10 + $0x10] sm:$0xf]
    %v1626 = vld [vmem:[#allocation10 + $0x14] sm:$0xf]
    %v1627 = vld [vmem:[#allocation10 + $0x18] sm:$0xf]
    %v1628 = vld [vmem:[#allocation10 + $0x1c] sm:$0xf]
    %v1629 = vld [vmem:[#allocation10 + $0x20] sm:$0xf]
    %v1630 = vld [vmem:[#allocation10 + $0x24] sm:$0xf]
    %v1631 = vld [vmem:[#allocation10 + $0x28] sm:$0xf]
    %v1632 = vld [vmem:[#allocation10 + $0x2c] sm:$0xf]
    %v1633 = vld [vmem:[#allocation10 + $0x30] sm:$0xf]
    %v1634 = vld [vmem:[#allocation10 + $0x34] sm:$0xf]
    %v1635 = vld [vmem:[#allocation10 + $0x38] sm:$0xf]
    %v1636 = vld [vmem:[#allocation10 + $0x3c] sm:$0xf]
    %v1637 = vld [vmem:[%s8] sm:$0x1]
    %v1639 = vperm.slane %v1637, 0
    %v1657 = vunpack.c.l.b16 %v1621
    %v1658 = vunpack.c.l.b16 %v1622
    %v1659 = vunpack.c.l.b16 %v1623
    %v1660 = vunpack.c.l.b16 %v1624
    %v1661 = vunpack.c.l.b16 %v1625
    %v1662 = vunpack.c.l.b16 %v1626
    %v1663 = vunpack.c.l.b16 %v1627
    %v1664 = vunpack.c.l.b16 %v1628
    %v1665 = vunpack.c.l.b16 %v1629
    %v1666 = vunpack.c.l.b16 %v1630
    %v1667 = vunpack.c.l.b16 %v1631
    %v1668 = vunpack.c.l.b16 %v1632
    %v1669 = vunpack.c.l.b16 %v1633
    %v1670 = vunpack.c.l.b16 %v1634
    %v1671 = vunpack.c.l.b16 %v1635
    %v1672 = vunpack.c.l.b16 %v1636
    %v1673 = vpack.c.b16 %v1658, %v1657
    %v1674 = vpack.c.b16 %v1660, %v1659
    %v1675 = vpack.c.b16 %v1662, %v1661
    %v1676 = vpack.c.b16 %v1664, %v1663
    %v1677 = vpack.c.b16 %v1666, %v1665
    %v1678 = vpack.c.b16 %v1668, %v1667
    %v1679 = vpack.c.b16 %v1670, %v1669
    %v1680 = vpack.c.b16 %v1672, %v1671
    %1689 = vmatpush.bf16.msra.mxu0 %v1680
    %1690 = vmatpush.bf16.msra.mxu0 %v1679
    %1691 = vmatpush.bf16.msra.mxu0 %v1678
    %1692 = vmatpush.bf16.msra.mxu0 %v1677
    %1693 = vmatpush.bf16.msra.mxu0 %v1676
    %1694 = vmatpush.bf16.msra.mxu0 %v1675
    %1695 = vmatpush.bf16.msra.mxu0 %v1674
    %1696 = vmatpush.bf16.msra.mxu0 %v1673
    %1697 = vmatmul.bf16.gmra.mxu0 %v1617
    %v1698 = vpop.f32.mrf.mxu0
    %v1699 = vadd.f32 %v1639, %v1698
    %v1700 = vpop.f32.mrf.mxu0
    %v1701 = vadd.f32 %v1639, %v1700
    %1702 = vmatmul.bf16.gmra.mxu0 %v1618
    %v1703 = vpop.f32.mrf.mxu0
    %v1704 = vadd.f32 %v1639, %v1703
    %v1705 = vpop.f32.mrf.mxu0
    %v1706 = vadd.f32 %v1639, %v1705
    %1707 = vmatmul.bf16.gmra.mxu0 %v1619
    %v1708 = vpop.f32.mrf.mxu0
    %v1709 = vadd.f32 %v1639, %v1708
    %v1710 = vpop.f32.mrf.mxu0
    %v1711 = vadd.f32 %v1639, %v1710
    %1712 = vmatmul.bf16.gmra.mxu0 %v1620
    %v1713 = vpop.f32.mrf.mxu0
    %v1714 = vadd.f32 %v1639, %v1713
    %v1715 = vpop.f32.mrf.mxu0
    %v1716 = vadd.f32 %v1639, %v1715
    %1717 = vdwg.mxu0
    %v1718 = vpack.c.bf16 %v1699, %v1699
    %v1719 = vpack.c.bf16 %v1701, %v1701
    %v1720 = vpack.c.bf16 %v1704, %v1704
    %v1721 = vpack.c.bf16 %v1706, %v1706
    %v1722 = vpack.c.bf16 %v1709, %v1709
    %v1723 = vpack.c.bf16 %v1711, %v1711
    %v1724 = vpack.c.bf16 %v1714, %v1714
    %v1725 = vpack.c.bf16 %v1716, %v1716
    %1726 = vst [vmem:[%s9] sm:$0xf] %v1718
    %1727 = vst [vmem:[%s9 + $0x4] sm:$0xf] %v1719
    %1728 = vst [vmem:[%s9 + $0x8] sm:$0xf] %v1720
    %1729 = vst [vmem:[%s9 + $0xc] sm:$0xf] %v1721
    %1730 = vst [vmem:[%s9 + $0x10] sm:$0xf] %v1722
    %1731 = vst [vmem:[%s9 + $0x14] sm:$0xf] %v1723
    %1732 = vst [vmem:[%s9 + $0x18] sm:$0xf] %v1724
    %1733 = vst [vmem:[%s9 + $0x1c] sm:$0xf] %v1725
    // Predicated region
    $region62: #{mlp_forward.1} parent=1 // pred_check
      _
    $region63: #{mlp_forward.1} parent=1 // pred_check_branch
      %1735 = sbr.rel (0) target = $region65
    $region64: #{mlp_forward.1} parent=1 // pred_region
      _
    $region65: #{mlp_forward.1} parent=1 // pred_fallthru
      _
    // Predicated region
    $region66: #{mlp_forward.1} parent=1 // pred_check
      _
    $region67: #{mlp_forward.1} parent=1 // pred_check_branch
      %1737 = sbr.rel (0) target = $region69
    $region68: #{mlp_forward.1} parent=1 // pred_region
      _
    $region69: #{mlp_forward.1} parent=1 // pred_fallthru
      _
    %1738 = vsyncpa [#allocation3], 1
    %1739 = vsyncpa [#allocation5], 1
    %1740 = vsyncpa [#allocation8], 1
    %1741 = vsyncpa [#allocation11], 1

</llo_original>
